<compile_context>
chip_gen: v7x
topology: tpu7x:2x2x1
jax: 0.10.0
libtpu: 0.0.40
codegen_flags: <defaults>
</compile_context>

<pallas_src>
import functools

import jax
import jax.numpy as jnp
from jax.experimental import pallas as pl
from jax.experimental.pallas import tpu as pltpu


def _round_up(x, m):
    return (x + m - 1) // m * m


# --------------------- fused conv-chain kernel (MXU) ------------------------

def _conv_chain_kernel(x_ref, bbw_ref, bbb_ref, aw_ref, ab_ref,
                       d1w_ref, d1b_ref, d2w_ref, d2b_ref,
                       feat_ref, logit_ref):
    # backbone patchify conv (im2col matmul) + ReLU
    x = x_ref[...]                                                     # (tm, Kp) bf16
    h0 = jnp.dot(x, bbw_ref[...], preferred_element_type=jnp.float32)
    h0 = jnp.maximum(h0 + bbb_ref[...], 0.0)                           # (tm, 512) f32
    # ASPP 1x1 + ReLU  (this is the `feat` the module returns)
    h1 = jnp.dot(h0.astype(jnp.bfloat16), aw_ref[...],
                 preferred_element_type=jnp.float32)
    h1 = jnp.maximum(h1 + ab_ref[...], 0.0)                            # (tm, 256) f32
    feat_ref[...] = h1
    # decoder_axis: 1x1 + ReLU, then classifier 1x1 (N padded to 128 lanes)
    h2 = jnp.dot(h1.astype(jnp.bfloat16), d1w_ref[...],
                 preferred_element_type=jnp.float32)
    h2 = jnp.maximum(h2 + d1b_ref[...], 0.0)                           # (tm, 256) f32
    h3 = jnp.dot(h2.astype(jnp.bfloat16), d2w_ref[...],
                 preferred_element_type=jnp.float32)
    logit_ref[...] = h3 + d2b_ref[...]                                 # (tm, 128) f32


def conv_chain(x_bf16, bbw, bbb, aw, ab, d1w, d1b, d2w, d2b, *, tm):
    M_pad, K_pad = x_bf16.shape
    C1 = bbw.shape[1]
    C2 = aw.shape[1]
    C3 = d1w.shape[1]
    C4 = d2w.shape[1]
    grid = (M_pad // tm,)

    wbytes = 2 * (K_pad * C1 + C1 * C2 + C2 * C3 + C3 * C4)
    flops = 2 * M_pad * (K_pad * C1 + C1 * C2 + C2 * C3 + C3 * C4)
    bytes_accessed = (M_pad * K_pad * 2 + M_pad * (C2 + C4) * 4 + wbytes
                      + 4 * (C1 + C2 + C3 + C4))

    return pl.pallas_call(
        _conv_chain_kernel,
        grid=grid,
        in_specs=[
            pl.BlockSpec((tm, K_pad), lambda i: (i, 0)),   # streamed rows
            pl.BlockSpec((K_pad, C1), lambda i: (0, 0)),   # VMEM-resident weights
            pl.BlockSpec((1, C1), lambda i: (0, 0)),
            pl.BlockSpec((C1, C2), lambda i: (0, 0)),
            pl.BlockSpec((1, C2), lambda i: (0, 0)),
            pl.BlockSpec((C2, C3), lambda i: (0, 0)),
            pl.BlockSpec((1, C3), lambda i: (0, 0)),
            pl.BlockSpec((C3, C4), lambda i: (0, 0)),
            pl.BlockSpec((1, C4), lambda i: (0, 0)),
        ],
        out_specs=(
            pl.BlockSpec((tm, C2), lambda i: (i, 0)),      # feat (lane-dense 256)
            pl.BlockSpec((tm, C4), lambda i: (i, 0)),      # logits (lane-dense 128)
        ),
        out_shape=(
            jax.ShapeDtypeStruct((M_pad, C2), jnp.float32),
            jax.ShapeDtypeStruct((M_pad, C4), jnp.float32),
        ),
        compiler_params=pltpu.CompilerParams(
            dimension_semantics=("parallel",),
            vmem_limit_bytes=48 * 1024 * 1024),
        cost_estimate=pl.CostEstimate(flops=flops, transcendentals=0,
                                      bytes_accessed=bytes_accessed),
    )(x_bf16, bbw, bbb, aw, ab, d1w, d1b, d2w, d2b)


# ---------- fused bilinear upsample + sigmoid + focal-loss kernel ------------

def _upsample_focal_kernel(o_ref, r_ref, ct_ref, lbl_ref, prob_ref, loss_ref,
                           *, alpha):
    o = o_ref[0]                                                       # (hp, wp) f32
    up = jnp.dot(r_ref[...], o, preferred_element_type=jnp.float32)    # (Htp, wp)
    x = jnp.dot(up, ct_ref[...], preferred_element_type=jnp.float32)   # (Htp, Wtp)
    t = lbl_ref[0]
    p = jax.nn.sigmoid(x)
    # numerically stable BCE-with-logits (reduction='none')
    ce = jnp.maximum(x, 0.0) - x * t + jnp.log1p(jnp.exp(-jnp.abs(x)))
    p_t = p * t + (1.0 - p) * (1.0 - t)
    one_m = 1.0 - p_t
    focal = ce * (one_m * one_m)            # gamma=2 as explicit square (VALU)
    alpha_t = alpha * t + (1.0 - alpha) * (1.0 - t)
    prob_ref[0] = p
    loss_ref[0] = alpha_t * focal


def upsample_sigmoid_focal(o_pad, r_pad, ct_pad, lbl_pad, alpha=0.95):
    B, h_p, w_p = o_pad.shape
    Ht_p = r_pad.shape[0]
    Wt_p = ct_pad.shape[1]
    kernel = functools.partial(_upsample_focal_kernel, alpha=alpha)

    flops = 2 * B * (Ht_p * h_p * w_p + Ht_p * w_p * Wt_p) + 12 * B * Ht_p * Wt_p
    transcendentals = 3 * B * Ht_p * Wt_p
    bytes_accessed = (B * (h_p * w_p + 3 * Ht_p * Wt_p) * 4
                      + (Ht_p * h_p + w_p * Wt_p) * 4)

    return pl.pallas_call(
        kernel,
        grid=(B,),
        in_specs=[
            pl.BlockSpec((1, h_p, w_p), lambda b: (b, 0, 0)),
            pl.BlockSpec((Ht_p, h_p), lambda b: (0, 0)),
            pl.BlockSpec((w_p, Wt_p), lambda b: (0, 0)),
            pl.BlockSpec((1, Ht_p, Wt_p), lambda b: (b, 0, 0)),
        ],
        out_specs=(
            pl.BlockSpec((1, Ht_p, Wt_p), lambda b: (b, 0, 0)),
            pl.BlockSpec((1, Ht_p, Wt_p), lambda b: (b, 0, 0)),
        ),
        out_shape=(
            jax.ShapeDtypeStruct((B, Ht_p, Wt_p), jnp.float32),
            jax.ShapeDtypeStruct((B, Ht_p, Wt_p), jnp.float32),
        ),
        compiler_params=pltpu.CompilerParams(
            dimension_semantics=("parallel",),
            vmem_limit_bytes=48 * 1024 * 1024),
        cost_estimate=pl.CostEstimate(flops=flops,
                                      transcendentals=transcendentals,
                                      bytes_accessed=bytes_accessed),
    )(o_pad, r_pad, ct_pad, lbl_pad)


# ------------------------------ parameters ----------------------------------

def init_params(key, depth=18):
    res_featdim = {18: 512, 34: 512, 50: 2048, 101: 2048}[depth]
    featdim = 256
    last_convout = 256
    num_classes = 1

    ks = jax.random.split(key, 4)

    def he(k, shape, fan_in):
        return jax.random.normal(k, shape, jnp.float32) * jnp.sqrt(2.0 / fan_in)

    return {
        # backbone stand-in: patchify conv k=8,s=8 : 3*8*8 -> 512 (output_stride=8)
        "bb_w": he(ks[0], (8 * 8 * 3, res_featdim), 8 * 8 * 3),
        "bb_b": jnp.zeros((res_featdim,), jnp.float32),
        # ASPP stand-in: 1x1 conv 512 -> 256
        "aspp_w": he(ks[1], (res_featdim, featdim), res_featdim),
        "aspp_b": jnp.zeros((featdim,), jnp.float32),
        # decoder_axis (last_conv_only): 1x1 256->256 (ReLU), 1x1 256->num_classes
        "dec_w1": he(ks[2], (featdim, last_convout), featdim),
        "dec_b1": jnp.zeros((last_convout,), jnp.float32),
        "dec_w2": he(ks[3], (last_convout, num_classes), last_convout),
        "dec_b2": jnp.zeros((num_classes,), jnp.float32),
    }


# ------------------------------ glue / wrapper -------------------------------

def _bilinear_matrix(out_size, in_size):
    """Row-interpolation matrix for bilinear resize with align_corners=True."""
    if in_size == 1:
        return jnp.ones((out_size, 1), jnp.float32)
    src = jnp.arange(out_size, dtype=jnp.float32) * (in_size - 1) / (out_size - 1)
    i0 = jnp.clip(jnp.floor(src).astype(jnp.int32), 0, in_size - 2)
    frac = src - i0.astype(jnp.float32)
    rows = jnp.arange(out_size)
    m = jnp.zeros((out_size, in_size), jnp.float32)
    m = m.at[rows, i0].add(1.0 - frac)
    m = m.at[rows, i0 + 1].add(frac)
    return m


def forward(params, img, lbl, mask=None, is_syn=None):
    """feat = aspp(backbone(img)); out = decoder_axis(None, feat);
       axis_out = sigmoid(interp(out)); loss = sigmoid_focal_loss(..., alpha=0.95).
       Returns (axis_out, feat, loss, losses)."""
    B, C, H, W = img.shape
    s = 8  # output_stride
    h, w = H // s, W // s
    M = B * h * w

    # ---- im2col patchify (layout only), zero-pad K to a lane multiple (192->256)
    x = jnp.transpose(img, (0, 2, 3, 1)).reshape(B, h, s, w, s, C)
    x = jnp.transpose(x, (0, 1, 3, 2, 4, 5)).reshape(M, s * s * C)
    K = s * s * C
    K_pad = _round_up(K, 128)
    x = jnp.pad(x, ((0, 0), (0, K_pad - K)))

    # ---- tile M for the pipelined fused kernel
    tm = 512 if M >= 512 else _round_up(M, 8)
    M_pad = _round_up(M, tm)
    if M_pad != M:
        x = jnp.pad(x, ((0, M_pad - M), (0, 0)))
    x = x.astype(jnp.bfloat16)

    # ---- bf16 weights (f32 accumulation inside the kernel), padded classifier
    bbw = jnp.pad(params["bb_w"], ((0, K_pad - K), (0, 0))).astype(jnp.bfloat16)
    bbb = params["bb_b"].reshape(1, -1)
    aw = params["aspp_w"].astype(jnp.bfloat16)
    ab = params["aspp_b"].reshape(1, -1)
    d1w = params["dec_w1"].astype(jnp.bfloat16)
    d1b = params["dec_b1"].reshape(1, -1)
    nc = params["dec_w2"].shape[1]                      # num_classes = 1
    nc_pad = _round_up(nc, 128)                         # lane-dense classifier out
    d2w = jnp.pad(params["dec_w2"], ((0, 0), (0, nc_pad - nc))).astype(jnp.bfloat16)
    d2b = jnp.pad(params["dec_b2"], (0, nc_pad - nc)).reshape(1, -1)

    # ---- fused backbone + ASPP + decoder_axis (single pallas_call)
    feat_flat, logit_pad = conv_chain(x, bbw, bbb, aw, ab, d1w, d1b, d2w, d2b,
                                      tm=tm)
    feat_flat = feat_flat[:M]                           # (M, 256) f32
    out_small = logit_pad[:M, 0].reshape(B, h, w)       # low-res logits (B,h,w)

    # ---- fused bilinear upsample (align_corners=True) + sigmoid + focal loss
    Ht, Wt = lbl.shape[2], lbl.shape[3]
    R = _bilinear_matrix(Ht, h)                         # (Ht, h)
    CmT = _bilinear_matrix(Wt, w).T                     # (w, Wt)

    h_p = _round_up(h, 128)                             # aligned MXU contraction
    w_p = _round_up(w, 128)
    Ht_p = _round_up(Ht, 8)
    Wt_p = _round_up(Wt, 128)

    o_pad = jnp.pad(out_small, ((0, 0), (0, h_p - h), (0, w_p - w)))
    R_pad = jnp.pad(R, ((0, Ht_p - Ht), (0, h_p - h)))
    CmT_pad = jnp.pad(CmT, ((0, w_p - w), (0, Wt_p - Wt)))
    lbl_f = lbl.astype(jnp.float32).reshape(B, Ht, Wt)
    lbl_pad = jnp.pad(lbl_f, ((0, 0), (0, Ht_p - Ht), (0, Wt_p - Wt)))

    prob_pad, loss_pad = upsample_sigmoid_focal(o_pad, R_pad, CmT_pad, lbl_pad,
                                                alpha=0.95)

    axis_out = prob_pad[:, :Ht, :Wt].reshape(B, 1, Ht, Wt)
    axis_loss = loss_pad[:, :Ht, :Wt].reshape(B, 1, Ht, Wt)
    feat_nchw = jnp.transpose(feat_flat.reshape(B, h, w, -1), (0, 3, 1, 2))

    loss = axis_loss
    losses = (axis_loss, axis_loss)
    # TODO(synk): get_theta branch (decoder_theta, softmax/clamp, weighted
    #             cross-entropy theta loss with max_pool2d labels) omitted
    #             because get_theta=0 in this configuration.
    return axis_out, feat_nchw, loss, losses


# --------------------------------- main --------------------------------------

if __name__ == "__main__":
    key = jax.random.PRNGKey(0)
    kp, ki, kl = jax.random.split(key, 3)

    params = init_params(kp, depth=18)

    B, H, W = 2, 32, 32
    img = jax.random.normal(ki, (B, 3, H, W), jnp.float32)             # NCHW image
    lbl = (jax.random.uniform(kl, (B, 1, H, W)) > 0.9).astype(jnp.float32)

    axis_out, feat, loss, losses = jax.jit(forward)(params, img, lbl)
    jax.block_until_ready((axis_out, feat, loss, losses))

    assert axis_out.shape == (B, 1, H, W)
    assert feat.shape == (B, 256, H // 8, W // 8)
    assert loss.shape == (B, 1, H, W)
    print("KERNEL_OK")
</pallas_src>

<mosaic_0001>
module attributes {stable_mosaic.version = 11 : i64} {
  func.func private @main(%arg0: i32) attributes {dimension_semantics = [#tpu.dimension_semantics<core_parallel>], iteration_bounds = array<i64: 2>, tpu.core_type = #tpu.core_type<sc_scalar_subcore>, window_params = []} {
    return
  }
}

module attributes {stable_mosaic.version = 11 : i64} {
  func.func private @main(%arg0: i32) attributes {dimension_semantics = [#tpu.dimension_semantics<core_parallel>], iteration_bounds = array<i64: 2>, tpu.core_type = #tpu.core_type<sc_scalar_subcore>, window_params = []} {
    return
  }
}

module attributes {stable_mosaic.version = 11 : i64} {
  func.func @_conv_chain_kernel(%arg0: i32, %arg1: memref<32x256xbf16, #tpu.memory_space<vmem>>, %arg2: memref<256x512xbf16, #tpu.memory_space<vmem>>, %arg3: memref<1x512xf32, #tpu.memory_space<vmem>>, %arg4: memref<512x256xbf16, #tpu.memory_space<vmem>>, %arg5: memref<1x256xf32, #tpu.memory_space<vmem>>, %arg6: memref<256x256xbf16, #tpu.memory_space<vmem>>, %arg7: memref<1x256xf32, #tpu.memory_space<vmem>>, %arg8: memref<256x128xbf16, #tpu.memory_space<vmem>>, %arg9: memref<1x128xf32, #tpu.memory_space<vmem>>, %arg10: memref<32x256xf32, #tpu.memory_space<vmem>>, %arg11: memref<32x128xf32, #tpu.memory_space<vmem>>) attributes {dimension_semantics = [#tpu.dimension_semantics<parallel>], iteration_bounds = array<i64: 1>, scalar_prefetch = 0 : i64, scratch_operands = 0 : i64, tpu.core_type = #tpu.core_type<tc>, window_params = [{transform_indices = @transform_0, window_bounds = array<i64: 32, 256>}, {pipeline_mode = #tpu.pipeline_mode<synchronous>, transform_indices = @transform_1, window_bounds = array<i64: 256, 512>}, {pipeline_mode = #tpu.pipeline_mode<synchronous>, transform_indices = @transform_2, window_bounds = array<i64: 1, 512>}, {pipeline_mode = #tpu.pipeline_mode<synchronous>, transform_indices = @transform_3, window_bounds = array<i64: 512, 256>}, {pipeline_mode = #tpu.pipeline_mode<synchronous>, transform_indices = @transform_4, window_bounds = array<i64: 1, 256>}, {pipeline_mode = #tpu.pipeline_mode<synchronous>, transform_indices = @transform_5, window_bounds = array<i64: 256, 256>}, {pipeline_mode = #tpu.pipeline_mode<synchronous>, transform_indices = @transform_6, window_bounds = array<i64: 1, 256>}, {pipeline_mode = #tpu.pipeline_mode<synchronous>, transform_indices = @transform_7, window_bounds = array<i64: 256, 128>}, {pipeline_mode = #tpu.pipeline_mode<synchronous>, transform_indices = @transform_8, window_bounds = array<i64: 1, 128>}, {transform_indices = @transform_9, window_bounds = array<i64: 32, 256>}, {transform_indices = @transform_10, window_bounds = array<i64: 32, 128>}]} {
    %c0 = arith.constant 0 : index
    %c0_0 = arith.constant 0 : index
    %0 = vector.load %arg1[%c0, %c0_0] : memref<32x256xbf16, #tpu.memory_space<vmem>>, vector<32x256xbf16>
    %c0_1 = arith.constant 0 : index
    %c0_2 = arith.constant 0 : index
    %1 = vector.load %arg2[%c0_1, %c0_2] : memref<256x512xbf16, #tpu.memory_space<vmem>>, vector<256x512xbf16>
    %cst = arith.constant dense<0.000000e+00> : vector<32x512xf32>
    %2 = tpu.matmul %0, %1, %cst {dimension_numbers = #tpu.dot_dimension_numbers<[1], [0], [0], [1], [0, 0, 1, 1], [], []>} : vector<32x256xbf16>, vector<256x512xbf16>, vector<32x512xf32> -> vector<32x512xf32>
    %c0_3 = arith.constant 0 : index
    %c0_4 = arith.constant 0 : index
    %3 = vector.load %arg3[%c0_3, %c0_4] : memref<1x512xf32, #tpu.memory_space<vmem>>, vector<1x512xf32>
    %4 = vector.broadcast %3 : vector<1x512xf32> to vector<32x512xf32>
    %5 = arith.addf %2, %4 : vector<32x512xf32>
    %cst_5 = arith.constant 0.000000e+00 : f32
    %6 = vector.broadcast %cst_5 : f32 to vector<32x512xf32>
    %7 = arith.maximumf %5, %6 : vector<32x512xf32>
    %8 = arith.truncf %7 : vector<32x512xf32> to vector<32x512xbf16>
    %c0_6 = arith.constant 0 : index
    %c0_7 = arith.constant 0 : index
    %9 = vector.load %arg4[%c0_6, %c0_7] : memref<512x256xbf16, #tpu.memory_space<vmem>>, vector<512x256xbf16>
    %cst_8 = arith.constant dense<0.000000e+00> : vector<32x256xf32>
    %10 = tpu.matmul %8, %9, %cst_8 {dimension_numbers = #tpu.dot_dimension_numbers<[1], [0], [0], [1], [0, 0, 1, 1], [], []>} : vector<32x512xbf16>, vector<512x256xbf16>, vector<32x256xf32> -> vector<32x256xf32>
    %c0_9 = arith.constant 0 : index
    %c0_10 = arith.constant 0 : index
    %11 = vector.load %arg5[%c0_9, %c0_10] : memref<1x256xf32, #tpu.memory_space<vmem>>, vector<1x256xf32>
    %12 = vector.broadcast %11 : vector<1x256xf32> to vector<32x256xf32>
    %13 = arith.addf %10, %12 : vector<32x256xf32>
    %cst_11 = arith.constant 0.000000e+00 : f32
    %14 = vector.broadcast %cst_11 : f32 to vector<32x256xf32>
    %15 = arith.maximumf %13, %14 : vector<32x256xf32>
    %c0_12 = arith.constant 0 : index
    %c0_13 = arith.constant 0 : index
    %16 = vector.load %arg10[%c0_12, %c0_13] : memref<32x256xf32, #tpu.memory_space<vmem>>, vector<32x256xf32>
    tpu.vector_store %arg10[%c0_12, %c0_13], %15 {strides = array<i32>} : memref<32x256xf32, #tpu.memory_space<vmem>>, vector<32x256xf32>,
    %17 = arith.truncf %15 : vector<32x256xf32> to vector<32x256xbf16>
    %c0_14 = arith.constant 0 : index
    %c0_15 = arith.constant 0 : index
    %18 = vector.load %arg6[%c0_14, %c0_15] : memref<256x256xbf16, #tpu.memory_space<vmem>>, vector<256x256xbf16>
    %cst_16 = arith.constant dense<0.000000e+00> : vector<32x256xf32>
    %19 = tpu.matmul %17, %18, %cst_16 {dimension_numbers = #tpu.dot_dimension_numbers<[1], [0], [0], [1], [0, 0, 1, 1], [], []>} : vector<32x256xbf16>, vector<256x256xbf16>, vector<32x256xf32> -> vector<32x256xf32>
    %c0_17 = arith.constant 0 : index
    %c0_18 = arith.constant 0 : index
    %20 = vector.load %arg7[%c0_17, %c0_18] : memref<1x256xf32, #tpu.memory_space<vmem>>, vector<1x256xf32>
    %21 = vector.broadcast %20 : vector<1x256xf32> to vector<32x256xf32>
    %22 = arith.addf %19, %21 : vector<32x256xf32>
    %cst_19 = arith.constant 0.000000e+00 : f32
    %23 = vector.broadcast %cst_19 : f32 to vector<32x256xf32>
    %24 = arith.maximumf %22, %23 : vector<32x256xf32>
    %25 = arith.truncf %24 : vector<32x256xf32> to vector<32x256xbf16>
    %c0_20 = arith.constant 0 : index
    %c0_21 = arith.constant 0 : index
    %26 = vector.load %arg8[%c0_20, %c0_21] : memref<256x128xbf16, #tpu.memory_space<vmem>>, vector<256x128xbf16>
    %cst_22 = arith.constant dense<0.000000e+00> : vector<32x128xf32>
    %27 = tpu.matmul %25, %26, %cst_22 {dimension_numbers = #tpu.dot_dimension_numbers<[1], [0], [0], [1], [0, 0, 1, 1], [], []>} : vector<32x256xbf16>, vector<256x128xbf16>, vector<32x128xf32> -> vector<32x128xf32>
    %c0_23 = arith.constant 0 : index
    %c0_24 = arith.constant 0 : index
    %28 = vector.load %arg9[%c0_23, %c0_24] : memref<1x128xf32, #tpu.memory_space<vmem>>, vector<1x128xf32>
    %29 = vector.broadcast %28 : vector<1x128xf32> to vector<32x128xf32>
    %30 = arith.addf %27, %29 : vector<32x128xf32>
    %c0_25 = arith.constant 0 : index
    %c0_26 = arith.constant 0 : index
    %31 = vector.load %arg11[%c0_25, %c0_26] : memref<32x128xf32, #tpu.memory_space<vmem>>, vector<32x128xf32>
    tpu.vector_store %arg11[%c0_25, %c0_26], %30 {strides = array<i32>} : memref<32x128xf32, #tpu.memory_space<vmem>>, vector<32x128xf32>,
    return
  }
  func.func @transform_0(%arg0: i32) -> (i32, i32) {
    %c0_i32 = arith.constant 0 : i32
    %c0_i32_0 = arith.constant 0 : i32
    return %arg0, %c0_i32 : i32, i32
  }
  func.func @transform_1(%arg0: i32) -> (i32, i32) {
    %c0_i32 = arith.constant 0 : i32
    %c0_i32_0 = arith.constant 0 : i32
    %c0_i32_1 = arith.constant 0 : i32
    return %c0_i32, %c0_i32_0 : i32, i32
  }
  func.func @transform_2(%arg0: i32) -> (i32, i32) {
    %c0_i32 = arith.constant 0 : i32
    %c0_i32_0 = arith.constant 0 : i32
    %c0_i32_1 = arith.constant 0 : i32
    return %c0_i32, %c0_i32_0 : i32, i32
  }
  func.func @transform_3(%arg0: i32) -> (i32, i32) {
    %c0_i32 = arith.constant 0 : i32
    %c0_i32_0 = arith.constant 0 : i32
    %c0_i32_1 = arith.constant 0 : i32
    return %c0_i32, %c0_i32_0 : i32, i32
  }
  func.func @transform_4(%arg0: i32) -> (i32, i32) {
    %c0_i32 = arith.constant 0 : i32
    %c0_i32_0 = arith.constant 0 : i32
    %c0_i32_1 = arith.constant 0 : i32
    return %c0_i32, %c0_i32_0 : i32, i32
  }
  func.func @transform_5(%arg0: i32) -> (i32, i32) {
    %c0_i32 = arith.constant 0 : i32
    %c0_i32_0 = arith.constant 0 : i32
    %c0_i32_1 = arith.constant 0 : i32
    return %c0_i32, %c0_i32_0 : i32, i32
  }
  func.func @transform_6(%arg0: i32) -> (i32, i32) {
    %c0_i32 = arith.constant 0 : i32
    %c0_i32_0 = arith.constant 0 : i32
    %c0_i32_1 = arith.constant 0 : i32
    return %c0_i32, %c0_i32_0 : i32, i32
  }
  func.func @transform_7(%arg0: i32) -> (i32, i32) {
    %c0_i32 = arith.constant 0 : i32
    %c0_i32_0 = arith.constant 0 : i32
    %c0_i32_1 = arith.constant 0 : i32
    return %c0_i32, %c0_i32_0 : i32, i32
  }
  func.func @transform_8(%arg0: i32) -> (i32, i32) {
    %c0_i32 = arith.constant 0 : i32
    %c0_i32_0 = arith.constant 0 : i32
    %c0_i32_1 = arith.constant 0 : i32
    return %c0_i32, %c0_i32_0 : i32, i32
  }
  func.func @transform_9(%arg0: i32) -> (i32, i32) {
    %c0_i32 = arith.constant 0 : i32
    %c0_i32_0 = arith.constant 0 : i32
    return %arg0, %c0_i32 : i32, i32
  }
  func.func @transform_10(%arg0: i32) -> (i32, i32) {
    %c0_i32 = arith.constant 0 : i32
    %c0_i32_0 = arith.constant 0 : i32
    return %arg0, %c0_i32 : i32, i32
  }
}

module attributes {stable_mosaic.version = 11 : i64} {
  func.func @_upsample_focal_kernel(%arg0: i32, %arg1: memref<1x128x128xf32, #tpu.memory_space<vmem>>, %arg2: memref<32x128xf32, #tpu.memory_space<vmem>>, %arg3: memref<128x128xf32, #tpu.memory_space<vmem>>, %arg4: memref<1x32x128xf32, #tpu.memory_space<vmem>>, %arg5: memref<1x32x128xf32, #tpu.memory_space<vmem>>, %arg6: memref<1x32x128xf32, #tpu.memory_space<vmem>>) attributes {dimension_semantics = [#tpu.dimension_semantics<parallel>], iteration_bounds = array<i64: 2>, scalar_prefetch = 0 : i64, scratch_operands = 0 : i64, tpu.core_type = #tpu.core_type<tc>, window_params = [{transform_indices = @transform_0, window_bounds = array<i64: 1, 128, 128>}, {pipeline_mode = #tpu.pipeline_mode<synchronous>, transform_indices = @transform_1, window_bounds = array<i64: 32, 128>}, {pipeline_mode = #tpu.pipeline_mode<synchronous>, transform_indices = @transform_2, window_bounds = array<i64: 128, 128>}, {transform_indices = @transform_3, window_bounds = array<i64: 1, 32, 128>}, {transform_indices = @transform_4, window_bounds = array<i64: 1, 32, 128>}, {transform_indices = @transform_5, window_bounds = array<i64: 1, 32, 128>}]} {
    %c0 = arith.constant 0 : index
    %c0_0 = arith.constant 0 : index
    %c0_1 = arith.constant 0 : index
    %0 = vector.load %arg1[%c0, %c0_0, %c0_1] : memref<1x128x128xf32, #tpu.memory_space<vmem>>, vector<1x128x128xf32>
    %1 = vector.shape_cast %0 : vector<1x128x128xf32> to vector<128x128xf32>
    %c0_2 = arith.constant 0 : index
    %c0_3 = arith.constant 0 : index
    %2 = vector.load %arg2[%c0_2, %c0_3] : memref<32x128xf32, #tpu.memory_space<vmem>>, vector<32x128xf32>
    %cst = arith.constant dense<0.000000e+00> : vector<32x128xf32>
    %3 = tpu.matmul %2, %1, %cst {dimension_numbers = #tpu.dot_dimension_numbers<[1], [0], [0], [1], [0, 0, 1, 1], [], []>} : vector<32x128xf32>, vector<128x128xf32>, vector<32x128xf32> -> vector<32x128xf32>
    %c0_4 = arith.constant 0 : index
    %c0_5 = arith.constant 0 : index
    %4 = vector.load %arg3[%c0_4, %c0_5] : memref<128x128xf32, #tpu.memory_space<vmem>>, vector<128x128xf32>
    %cst_6 = arith.constant dense<0.000000e+00> : vector<32x128xf32>
    %5 = tpu.matmul %3, %4, %cst_6 {dimension_numbers = #tpu.dot_dimension_numbers<[1], [0], [0], [1], [0, 0, 1, 1], [], []>} : vector<32x128xf32>, vector<128x128xf32>, vector<32x128xf32> -> vector<32x128xf32>
    %c0_7 = arith.constant 0 : index
    %c0_8 = arith.constant 0 : index
    %c0_9 = arith.constant 0 : index
    %6 = vector.load %arg4[%c0_7, %c0_8, %c0_9] : memref<1x32x128xf32, #tpu.memory_space<vmem>>, vector<1x32x128xf32>
    %7 = vector.shape_cast %6 : vector<1x32x128xf32> to vector<32x128xf32>
    %8 = arith.negf %5 : vector<32x128xf32>
    %9 = math.exp %8 : vector<32x128xf32>
    %cst_10 = arith.constant 1.000000e+00 : f32
    %10 = vector.broadcast %cst_10 : f32 to vector<32x128xf32>
    %11 = arith.addf %10, %9 : vector<32x128xf32>
    %12 = arith.divf %10, %11 : vector<32x128xf32>
    %cst_11 = arith.constant 0.000000e+00 : f32
    %13 = vector.broadcast %cst_11 : f32 to vector<32x128xf32>
    %14 = arith.maximumf %5, %13 : vector<32x128xf32>
    %15 = arith.mulf %5, %7 : vector<32x128xf32>
    %16 = arith.subf %14, %15 : vector<32x128xf32>
    %17 = math.absf %5 : vector<32x128xf32>
    %cst_12 = arith.constant 0.000000e+00 : f32
    %18 = vector.broadcast %cst_12 : f32 to vector<32x128xf32>
    %19 = arith.subf %18, %17 : vector<32x128xf32>
    %20 = math.exp %19 : vector<32x128xf32>
    %21 = math.log1p %20 : vector<32x128xf32>
    %22 = arith.addf %16, %21 : vector<32x128xf32>
    %23 = arith.mulf %12, %7 : vector<32x128xf32>
    %cst_13 = arith.constant 1.000000e+00 : f32
    %24 = vector.broadcast %cst_13 : f32 to vector<32x128xf32>
    %25 = arith.subf %24, %12 : vector<32x128xf32>
    %cst_14 = arith.constant 1.000000e+00 : f32
    %26 = vector.broadcast %cst_14 : f32 to vector<32x128xf32>
    %27 = arith.subf %26, %7 : vector<32x128xf32>
    %28 = arith.mulf %25, %27 : vector<32x128xf32>
    %29 = arith.addf %23, %28 : vector<32x128xf32>
    %cst_15 = arith.constant 1.000000e+00 : f32
    %30 = vector.broadcast %cst_15 : f32 to vector<32x128xf32>
    %31 = arith.subf %30, %29 : vector<32x128xf32>
    %32 = arith.mulf %31, %31 : vector<32x128xf32>
    %33 = arith.mulf %22, %32 : vector<32x128xf32>
    %cst_16 = arith.constant 0.949999988 : f32
    %34 = vector.broadcast %cst_16 : f32 to vector<32x128xf32>
    %35 = arith.mulf %34, %7 : vector<32x128xf32>
    %cst_17 = arith.constant 1.000000e+00 : f32
    %36 = vector.broadcast %cst_17 : f32 to vector<32x128xf32>
    %37 = arith.subf %36, %7 : vector<32x128xf32>
    %cst_18 = arith.constant 5.000000e-02 : f32
    %38 = vector.broadcast %cst_18 : f32 to vector<32x128xf32>
    %39 = arith.mulf %38, %37 : vector<32x128xf32>
    %40 = arith.addf %35, %39 : vector<32x128xf32>
    %c0_19 = arith.constant 0 : index
    %c0_20 = arith.constant 0 : index
    %c0_21 = arith.constant 0 : index
    %41 = vector.load %arg5[%c0_19, %c0_20, %c0_21] : memref<1x32x128xf32, #tpu.memory_space<vmem>>, vector<1x32x128xf32>
    %42 = vector.shape_cast %41 : vector<1x32x128xf32> to vector<32x128xf32>
    %43 = vector.shape_cast %12 : vector<32x128xf32> to vector<1x32x128xf32>
    tpu.vector_store %arg5[%c0_19, %c0_20, %c0_21], %43 {strides = array<i32>} : memref<1x32x128xf32, #tpu.memory_space<vmem>>, vector<1x32x128xf32>,
    %44 = arith.mulf %40, %33 : vector<32x128xf32>
    %c0_22 = arith.constant 0 : index
    %c0_23 = arith.constant 0 : index
    %c0_24 = arith.constant 0 : index
    %45 = vector.load %arg6[%c0_22, %c0_23, %c0_24] : memref<1x32x128xf32, #tpu.memory_space<vmem>>, vector<1x32x128xf32>
    %46 = vector.shape_cast %45 : vector<1x32x128xf32> to vector<32x128xf32>
    %47 = vector.shape_cast %44 : vector<32x128xf32> to vector<1x32x128xf32>
    tpu.vector_store %arg6[%c0_22, %c0_23, %c0_24], %47 {strides = array<i32>} : memref<1x32x128xf32, #tpu.memory_space<vmem>>, vector<1x32x128xf32>,
    return
  }
  func.func @transform_0(%arg0: i32) -> (i32, i32, i32) {
    %c0_i32 = arith.constant 0 : i32
    %c0_i32_0 = arith.constant 0 : i32
    %c0_i32_1 = arith.constant 0 : i32
    return %arg0, %c0_i32, %c0_i32_0 : i32, i32, i32
  }
  func.func @transform_1(%arg0: i32) -> (i32, i32) {
    %c0_i32 = arith.constant 0 : i32
    %c0_i32_0 = arith.constant 0 : i32
    %c0_i32_1 = arith.constant 0 : i32
    return %c0_i32, %c0_i32_0 : i32, i32
  }
  func.func @transform_2(%arg0: i32) -> (i32, i32) {
    %c0_i32 = arith.constant 0 : i32
    %c0_i32_0 = arith.constant 0 : i32
    %c0_i32_1 = arith.constant 0 : i32
    return %c0_i32, %c0_i32_0 : i32, i32
  }
  func.func @transform_3(%arg0: i32) -> (i32, i32, i32) {
    %c0_i32 = arith.constant 0 : i32
    %c0_i32_0 = arith.constant 0 : i32
    %c0_i32_1 = arith.constant 0 : i32
    return %arg0, %c0_i32, %c0_i32_0 : i32, i32, i32
  }
  func.func @transform_4(%arg0: i32) -> (i32, i32, i32) {
    %c0_i32 = arith.constant 0 : i32
    %c0_i32_0 = arith.constant 0 : i32
    %c0_i32_1 = arith.constant 0 : i32
    return %arg0, %c0_i32, %c0_i32_0 : i32, i32, i32
  }
  func.func @transform_5(%arg0: i32) -> (i32, i32, i32) {
    %c0_i32 = arith.constant 0 : i32
    %c0_i32_0 = arith.constant 0 : i32
    %c0_i32_1 = arith.constant 0 : i32
    return %arg0, %c0_i32, %c0_i32_0 : i32, i32, i32
  }
}

</mosaic_0001>

<llo_original>
// kernel: squeeze.1
$region0: #{squeeze.1}
  %s0 = inlined_call_operand.vmem [shape: f32[32], index: 0, kind: input, shape index: {}]
  %s1 = inlined_call_operand.vmem [shape: f32[2,4,4], index: 1, kind: output, shape index: {}]
  $region1: #{squeeze.1} parent=0
    #allocation0 [shape = 'u8[8192]{0}', space=vmem, size = 0x2000, scoped, tag = 'scoped mem for output reshape']
    #allocation1 [shape = 'u8[4096]{0}', space=vmem, size = 0x1000, scoped, tag = 'scoped mem for input reshape']
    %s3 = sshllo.u32 0, 1
    %v4 = vld [vmem:[%s0] sm:%s3]
    %5 = vst [vmem:[#allocation1] sm:%s3] %v4
    %v6 = vld [vmem:[#allocation1] sm:$0x1]
    %vm7 = vcmask 31744
    %8 = vst.msk [vmem:[#allocation0] sm:$0x1] %vm7, %v6
    %v9 = vld [vmem:[#allocation1] sm:$0x1]
    %10 = vrot.lane.b32.xlu0 %v9, 124
    %v11 = vpop.permute.xlu0 %10
    %vm12 = vcmask 31744
    %s13 = scalar_lea.vmem [#allocation0], 1
    %14 = vst.msk [vmem:[%s13] sm:$0x1] %vm12, %v11
    %v15 = vld [vmem:[#allocation1] sm:$0x1]
    %16 = vrot.lane.b32.xlu0 %v15, 120
    %v17 = vpop.permute.xlu0 %16
    %vm18 = vcmask 31744
    %s19 = scalar_lea.vmem [#allocation0], 2
    %20 = vst.msk [vmem:[%s19] sm:$0x1] %vm18, %v17
    %v21 = vld [vmem:[#allocation1] sm:$0x1]
    %22 = vrot.lane.b32.xlu0 %v21, 116
    %v23 = vpop.permute.xlu0 %22
    %vm24 = vcmask 31744
    %s25 = scalar_lea.vmem [#allocation0], 3
    %26 = vst.msk [vmem:[%s25] sm:$0x1] %vm24, %v23
    %v27 = vld [vmem:[#allocation1] sm:$0x1]
    %28 = vrot.lane.b32.xlu0 %v27, 112
    %v29 = vpop.permute.xlu0 %28
    %vm30 = vcmask 31744
    %s31 = scalar_lea.vmem [#allocation0], 8
    %32 = vst.msk [vmem:[%s31] sm:$0x1] %vm30, %v29
    %v33 = vld [vmem:[#allocation1] sm:$0x1]
    %34 = vrot.lane.b32.xlu0 %v33, 108
    %v35 = vpop.permute.xlu0 %34
    %vm36 = vcmask 31744
    %s37 = scalar_lea.vmem [#allocation0], 9
    %38 = vst.msk [vmem:[%s37] sm:$0x1] %vm36, %v35
    %v39 = vld [vmem:[#allocation1] sm:$0x1]
    %40 = vrot.lane.b32.xlu0 %v39, 104
    %v41 = vpop.permute.xlu0 %40
    %vm42 = vcmask 31744
    %s43 = scalar_lea.vmem [#allocation0], 10
    %44 = vst.msk [vmem:[%s43] sm:$0x1] %vm42, %v41
    %v45 = vld [vmem:[#allocation1] sm:$0x1]
    %46 = vrot.lane.b32.xlu0 %v45, 100
    %v47 = vpop.permute.xlu0 %46
    %vm48 = vcmask 31744
    %s49 = scalar_lea.vmem [#allocation0], 11
    %50 = vst.msk [vmem:[%s49] sm:$0x1] %vm48, %v47
    %s52 = sshllo.u32 0, 4
    %v54 = vld [vmem:[#allocation0] sm:%s52]
    %s55 = sshllo.u32 0, 4
    %56 = vst [vmem:[%s1] sm:%s55] %v54
    %s57 = scalar_lea.vmem [#allocation0], 8
    %v58 = vld [vmem:[%s57] sm:%s52]
    %s59 = sshllo.u32 0, 4
    %s60 = scalar_lea.vmem %s1, 4
    %61 = vst [vmem:[%s60] sm:%s59] %v58

// kernel: forward.2
$region0: #{forward.2}
  #allocation0 [shape = 'u32[]', space=smem, size = 0x4, offset = 0x4, fixed_abs, tag = 'smem constant byte address 0x4 - core index']
  #allocation1 [shape = 'u32[144,128]{1,0:T(1,128)}', space=vmem, size = 0x12000, scoped, tag = 'internal scratch']
  %s0 = inlined_call_operand.vmem [shape: bf16[32,256], index: 0, kind: input, shape index: {}]
  %s1 = inlined_call_operand.vmem [shape: bf16[256,512], index: 1, kind: input, shape index: {}]
  %s2 = inlined_call_operand.vmem [shape: f32[1,512], index: 2, kind: input, shape index: {}]
  %s3 = inlined_call_operand.vmem [shape: bf16[512,256], index: 3, kind: input, shape index: {}]
  %s4 = inlined_call_operand.vmem [shape: f32[1,256], index: 4, kind: input, shape index: {}]
  %s5 = inlined_call_operand.vmem [shape: bf16[256,256], index: 5, kind: input, shape index: {}]
  %s6 = inlined_call_operand.vmem [shape: f32[1,256], index: 6, kind: input, shape index: {}]
  %s7 = inlined_call_operand.vmem [shape: bf16[256,128], index: 7, kind: input, shape index: {}]
  %s8 = inlined_call_operand.vmem [shape: f32[1,128], index: 8, kind: input, shape index: {}]
  %s9 = inlined_call_operand.vmem [shape: f32[32,256], index: 9, kind: output, shape index: {0}]
  %s10 = inlined_call_operand.vmem [shape: f32[32,128], index: 10, kind: output, shape index: {1}]
  %11 = xla_tuple %s9, %s10
  %s12 = sld [smem:[#allocation0]]
  $region54: #{forward.2} parent=0
    _
  %s14 = ssub.s32 1, %s12
  %s15 = scalar_select 0, %s14, %s12
  // Predicated region
  $region2: #{forward.2} parent=0 // pred_check
    _
  $region3: #{forward.2} parent=0 // pred_check_branch
    %17 = sbr.rel (0) target = $region5
  $region4: #{forward.2} parent=0 // pred_region
    _
  $region5: #{forward.2} parent=0 // pred_fallthru
    _
  // Predicated region
  $region6: #{forward.2} parent=0 // pred_check
    _
  $region7: #{forward.2} parent=0 // pred_check_branch
    %19 = sbr.rel (0) target = $region9
  $region8: #{forward.2} parent=0 // pred_region
    _
  $region9: #{forward.2} parent=0 // pred_fallthru
    _
  // Predicated region
  $region10: #{forward.2} parent=0 // pred_check
    _
  $region11: #{forward.2} parent=0 // pred_check_branch
    %21 = sbr.rel (0) target = $region13
  $region12: #{forward.2} parent=0 // pred_region
    _
  $region13: #{forward.2} parent=0 // pred_fallthru
    _
  // Predicated region
  $region14: #{forward.2} parent=0 // pred_check
    _
  $region15: #{forward.2} parent=0 // pred_check_branch
    %23 = sbr.rel (0) target = $region17
  $region16: #{forward.2} parent=0 // pred_region
    _
  $region17: #{forward.2} parent=0 // pred_fallthru
    _
  // Predicated region
  $region18: #{forward.2} parent=0 // pred_check
    _
  $region19: #{forward.2} parent=0 // pred_check_branch
    %25 = sbr.rel (0) target = $region21
  $region20: #{forward.2} parent=0 // pred_region
    _
  $region21: #{forward.2} parent=0 // pred_fallthru
    _
  // Predicated region
  $region22: #{forward.2} parent=0 // pred_check
    _
  $region23: #{forward.2} parent=0 // pred_check_branch
    %27 = sbr.rel (0) target = $region25
  $region24: #{forward.2} parent=0 // pred_region
    _
  $region25: #{forward.2} parent=0 // pred_fallthru
    _
  // Predicated region
  $region26: #{forward.2} parent=0 // pred_check
    _
  $region27: #{forward.2} parent=0 // pred_check_branch
    %29 = sbr.rel (0) target = $region29
  $region28: #{forward.2} parent=0 // pred_region
    _
  $region29: #{forward.2} parent=0 // pred_fallthru
    _
  // Predicated region
  $region30: #{forward.2} parent=0 // pred_check
    _
  $region31: #{forward.2} parent=0 // pred_check_branch
    %31 = sbr.rel (0) target = $region33
  $region32: #{forward.2} parent=0 // pred_region
    _
  $region33: #{forward.2} parent=0 // pred_fallthru
    _
  // Predicated region
  $region34: #{forward.2} parent=0 // pred_check
    _
  $region35: #{forward.2} parent=0 // pred_check_branch
    %33 = sbr.rel (0) target = $region37
  $region36: #{forward.2} parent=0 // pred_region
    _
  $region37: #{forward.2} parent=0 // pred_fallthru
    _
  %v35 = vld [vmem:[%s0] sm:$0xff]
  %v36 = vld [vmem:[%s0 + $0x8] sm:$0xff]
  %v37 = vld [vmem:[%s0 + $0x10] sm:$0xff]
  %v38 = vld [vmem:[%s0 + $0x18] sm:$0xff]
  %v39 = vld [vmem:[%s1] sm:$0xff]
  %v40 = vld [vmem:[%s1 + $0x8] sm:$0xff]
  %v41 = vld [vmem:[%s1 + $0x10] sm:$0xff]
  %v42 = vld [vmem:[%s1 + $0x18] sm:$0xff]
  %v43 = vld [vmem:[%s1 + $0x20] sm:$0xff]
  %v44 = vld [vmem:[%s1 + $0x28] sm:$0xff]
  %v45 = vld [vmem:[%s1 + $0x30] sm:$0xff]
  %v46 = vld [vmem:[%s1 + $0x38] sm:$0xff]
  %v47 = vld [vmem:[%s1 + $0x40] sm:$0xff]
  %v48 = vld [vmem:[%s1 + $0x48] sm:$0xff]
  %v49 = vld [vmem:[%s1 + $0x50] sm:$0xff]
  %v50 = vld [vmem:[%s1 + $0x58] sm:$0xff]
  %v51 = vld [vmem:[%s1 + $0x60] sm:$0xff]
  %v52 = vld [vmem:[%s1 + $0x68] sm:$0xff]
  %v53 = vld [vmem:[%s1 + $0x70] sm:$0xff]
  %v54 = vld [vmem:[%s1 + $0x78] sm:$0xff]
  %v55 = vld [vmem:[%s1 + $0x80] sm:$0xff]
  %v56 = vld [vmem:[%s1 + $0x88] sm:$0xff]
  %v57 = vld [vmem:[%s1 + $0x90] sm:$0xff]
  %v58 = vld [vmem:[%s1 + $0x98] sm:$0xff]
  %v59 = vld [vmem:[%s1 + $0xa0] sm:$0xff]
  %v60 = vld [vmem:[%s1 + $0xa8] sm:$0xff]
  %v61 = vld [vmem:[%s1 + $0xb0] sm:$0xff]
  %v62 = vld [vmem:[%s1 + $0xb8] sm:$0xff]
  %v63 = vld [vmem:[%s1 + $0xc0] sm:$0xff]
  %v64 = vld [vmem:[%s1 + $0xc8] sm:$0xff]
  %v65 = vld [vmem:[%s1 + $0xd0] sm:$0xff]
  %v66 = vld [vmem:[%s1 + $0xd8] sm:$0xff]
  %v67 = vld [vmem:[%s1 + $0xe0] sm:$0xff]
  %v68 = vld [vmem:[%s1 + $0xe8] sm:$0xff]
  %v69 = vld [vmem:[%s1 + $0xf0] sm:$0xff]
  %v70 = vld [vmem:[%s1 + $0xf8] sm:$0xff]
  %v71 = vld [vmem:[%s1 + $0x100] sm:$0xff]
  %v72 = vld [vmem:[%s1 + $0x108] sm:$0xff]
  %v73 = vld [vmem:[%s1 + $0x110] sm:$0xff]
  %v74 = vld [vmem:[%s1 + $0x118] sm:$0xff]
  %v75 = vld [vmem:[%s1 + $0x120] sm:$0xff]
  %v76 = vld [vmem:[%s1 + $0x128] sm:$0xff]
  %v77 = vld [vmem:[%s1 + $0x130] sm:$0xff]
  %v78 = vld [vmem:[%s1 + $0x138] sm:$0xff]
  %v79 = vld [vmem:[%s1 + $0x140] sm:$0xff]
  %v80 = vld [vmem:[%s1 + $0x148] sm:$0xff]
  %v81 = vld [vmem:[%s1 + $0x150] sm:$0xff]
  %v82 = vld [vmem:[%s1 + $0x158] sm:$0xff]
  %v83 = vld [vmem:[%s1 + $0x160] sm:$0xff]
  %v84 = vld [vmem:[%s1 + $0x168] sm:$0xff]
  %v85 = vld [vmem:[%s1 + $0x170] sm:$0xff]
  %v86 = vld [vmem:[%s1 + $0x178] sm:$0xff]
  %v87 = vld [vmem:[%s1 + $0x180] sm:$0xff]
  %v88 = vld [vmem:[%s1 + $0x188] sm:$0xff]
  %v89 = vld [vmem:[%s1 + $0x190] sm:$0xff]
  %v90 = vld [vmem:[%s1 + $0x198] sm:$0xff]
  %v91 = vld [vmem:[%s1 + $0x1a0] sm:$0xff]
  %v92 = vld [vmem:[%s1 + $0x1a8] sm:$0xff]
  %v93 = vld [vmem:[%s1 + $0x1b0] sm:$0xff]
  %v94 = vld [vmem:[%s1 + $0x1b8] sm:$0xff]
  %v95 = vld [vmem:[%s1 + $0x1c0] sm:$0xff]
  %v96 = vld [vmem:[%s1 + $0x1c8] sm:$0xff]
  %v97 = vld [vmem:[%s1 + $0x1d0] sm:$0xff]
  %v98 = vld [vmem:[%s1 + $0x1d8] sm:$0xff]
  %v99 = vld [vmem:[%s1 + $0x1e0] sm:$0xff]
  %v100 = vld [vmem:[%s1 + $0x1e8] sm:$0xff]
  %v101 = vld [vmem:[%s1 + $0x1f0] sm:$0xff]
  %v102 = vld [vmem:[%s1 + $0x1f8] sm:$0xff]
  %v103 = vld [vmem:[%s2] sm:$0xf]
  %v105 = vlaneseq
  %v106 = vshrl.u32 %v105, 7
  %v107 = vsub.s32 0, %v106
  %v108 = vrot.slane %v103, %v107
  %v109 = vlaneseq
  %v110 = vshrl.u32 %v109, 7
  %v111 = vsub.s32 1, %v110
  %v112 = vrot.slane %v103, %v111
  %v113 = vlaneseq
  %v114 = vshrl.u32 %v113, 7
  %v115 = vsub.s32 2, %v114
  %v116 = vrot.slane %v103, %v115
  %v117 = vlaneseq
  %v118 = vshrl.u32 %v117, 7
  %v119 = vsub.s32 3, %v118
  %v120 = vrot.slane %v103, %v119
  %v129 = vunpack.c.l.b16 %v35
  %v130 = vunpack.c.h.b16 %v35
  %v131 = vunpack.c.l.b16 %v36
  %v132 = vunpack.c.h.b16 %v36
  %v133 = vunpack.c.l.b16 %v37
  %v134 = vunpack.c.h.b16 %v37
  %v135 = vunpack.c.l.b16 %v38
  %v136 = vunpack.c.h.b16 %v38
  %v137 = vpack.c.b16 %v131, %v129
  %v138 = vpack.c.b16 %v132, %v130
  %v139 = vpack.c.b16 %v135, %v133
  %v140 = vpack.c.b16 %v136, %v134
  %v209 = vunpack.c.l.b16 %v39
  %v210 = vunpack.c.h.b16 %v39
  %v211 = vunpack.c.l.b16 %v40
  %v212 = vunpack.c.h.b16 %v40
  %v213 = vunpack.c.l.b16 %v41
  %v214 = vunpack.c.h.b16 %v41
  %v215 = vunpack.c.l.b16 %v42
  %v216 = vunpack.c.h.b16 %v42
  %v217 = vunpack.c.l.b16 %v43
  %v218 = vunpack.c.h.b16 %v43
  %v219 = vunpack.c.l.b16 %v44
  %v220 = vunpack.c.h.b16 %v44
  %v221 = vunpack.c.l.b16 %v45
  %v222 = vunpack.c.h.b16 %v45
  %v223 = vunpack.c.l.b16 %v46
  %v224 = vunpack.c.h.b16 %v46
  %v225 = vunpack.c.l.b16 %v47
  %v226 = vunpack.c.h.b16 %v47
  %v227 = vunpack.c.l.b16 %v48
  %v228 = vunpack.c.h.b16 %v48
  %v229 = vunpack.c.l.b16 %v49
  %v230 = vunpack.c.h.b16 %v49
  %v231 = vunpack.c.l.b16 %v50
  %v232 = vunpack.c.h.b16 %v50
  %v233 = vunpack.c.l.b16 %v51
  %v234 = vunpack.c.h.b16 %v51
  %v235 = vunpack.c.l.b16 %v52
  %v236 = vunpack.c.h.b16 %v52
  %v237 = vunpack.c.l.b16 %v53
  %v238 = vunpack.c.h.b16 %v53
  %v239 = vunpack.c.l.b16 %v54
  %v240 = vunpack.c.h.b16 %v54
  %v241 = vunpack.c.l.b16 %v55
  %v242 = vunpack.c.h.b16 %v55
  %v243 = vunpack.c.l.b16 %v56
  %v244 = vunpack.c.h.b16 %v56
  %v245 = vunpack.c.l.b16 %v57
  %v246 = vunpack.c.h.b16 %v57
  %v247 = vunpack.c.l.b16 %v58
  %v248 = vunpack.c.h.b16 %v58
  %v249 = vunpack.c.l.b16 %v59
  %v250 = vunpack.c.h.b16 %v59
  %v251 = vunpack.c.l.b16 %v60
  %v252 = vunpack.c.h.b16 %v60
  %v253 = vunpack.c.l.b16 %v61
  %v254 = vunpack.c.h.b16 %v61
  %v255 = vunpack.c.l.b16 %v62
  %v256 = vunpack.c.h.b16 %v62
  %v257 = vunpack.c.l.b16 %v63
  %v258 = vunpack.c.h.b16 %v63
  %v259 = vunpack.c.l.b16 %v64
  %v260 = vunpack.c.h.b16 %v64
  %v261 = vunpack.c.l.b16 %v65
  %v262 = vunpack.c.h.b16 %v65
  %v263 = vunpack.c.l.b16 %v66
  %v264 = vunpack.c.h.b16 %v66
  %v265 = vunpack.c.l.b16 %v67
  %v266 = vunpack.c.h.b16 %v67
  %v267 = vunpack.c.l.b16 %v68
  %v268 = vunpack.c.h.b16 %v68
  %v269 = vunpack.c.l.b16 %v69
  %v270 = vunpack.c.h.b16 %v69
  %v271 = vunpack.c.l.b16 %v70
  %v272 = vunpack.c.h.b16 %v70
  %v273 = vunpack.c.l.b16 %v71
  %v274 = vunpack.c.h.b16 %v71
  %v275 = vunpack.c.l.b16 %v72
  %v276 = vunpack.c.h.b16 %v72
  %v277 = vunpack.c.l.b16 %v73
  %v278 = vunpack.c.h.b16 %v73
  %v279 = vunpack.c.l.b16 %v74
  %v280 = vunpack.c.h.b16 %v74
  %v281 = vunpack.c.l.b16 %v75
  %v282 = vunpack.c.h.b16 %v75
  %v283 = vunpack.c.l.b16 %v76
  %v284 = vunpack.c.h.b16 %v76
  %v285 = vunpack.c.l.b16 %v77
  %v286 = vunpack.c.h.b16 %v77
  %v287 = vunpack.c.l.b16 %v78
  %v288 = vunpack.c.h.b16 %v78
  %v289 = vunpack.c.l.b16 %v79
  %v290 = vunpack.c.h.b16 %v79
  %v291 = vunpack.c.l.b16 %v80
  %v292 = vunpack.c.h.b16 %v80
  %v293 = vunpack.c.l.b16 %v81
  %v294 = vunpack.c.h.b16 %v81
  %v295 = vunpack.c.l.b16 %v82
  %v296 = vunpack.c.h.b16 %v82
  %v297 = vunpack.c.l.b16 %v83
  %v298 = vunpack.c.h.b16 %v83
  %v299 = vunpack.c.l.b16 %v84
  %v300 = vunpack.c.h.b16 %v84
  %v301 = vunpack.c.l.b16 %v85
  %v302 = vunpack.c.h.b16 %v85
  %v303 = vunpack.c.l.b16 %v86
  %v304 = vunpack.c.h.b16 %v86
  %v305 = vunpack.c.l.b16 %v87
  %v306 = vunpack.c.h.b16 %v87
  %v307 = vunpack.c.l.b16 %v88
  %v308 = vunpack.c.h.b16 %v88
  %v309 = vunpack.c.l.b16 %v89
  %v310 = vunpack.c.h.b16 %v89
  %v311 = vunpack.c.l.b16 %v90
  %v312 = vunpack.c.h.b16 %v90
  %v313 = vunpack.c.l.b16 %v91
  %v314 = vunpack.c.h.b16 %v91
  %v315 = vunpack.c.l.b16 %v92
  %v316 = vunpack.c.h.b16 %v92
  %v317 = vunpack.c.l.b16 %v93
  %v318 = vunpack.c.h.b16 %v93
  %v319 = vunpack.c.l.b16 %v94
  %v320 = vunpack.c.h.b16 %v94
  %v321 = vunpack.c.l.b16 %v95
  %v322 = vunpack.c.h.b16 %v95
  %v323 = vunpack.c.l.b16 %v96
  %v324 = vunpack.c.h.b16 %v96
  %v325 = vunpack.c.l.b16 %v97
  %v326 = vunpack.c.h.b16 %v97
  %v327 = vunpack.c.l.b16 %v98
  %v328 = vunpack.c.h.b16 %v98
  %v329 = vunpack.c.l.b16 %v99
  %v330 = vunpack.c.h.b16 %v99
  %v331 = vunpack.c.l.b16 %v100
  %v332 = vunpack.c.h.b16 %v100
  %v333 = vunpack.c.l.b16 %v101
  %v334 = vunpack.c.h.b16 %v101
  %v335 = vunpack.c.l.b16 %v102
  %v336 = vunpack.c.h.b16 %v102
  %v337 = vpack.c.b16 %v213, %v209
  %v338 = vpack.c.b16 %v214, %v210
  %v339 = vpack.c.b16 %v215, %v211
  %v340 = vpack.c.b16 %v216, %v212
  %v341 = vpack.c.b16 %v221, %v217
  %v342 = vpack.c.b16 %v222, %v218
  %v343 = vpack.c.b16 %v223, %v219
  %v344 = vpack.c.b16 %v224, %v220
  %v345 = vpack.c.b16 %v229, %v225
  %v346 = vpack.c.b16 %v230, %v226
  %v347 = vpack.c.b16 %v231, %v227
  %v348 = vpack.c.b16 %v232, %v228
  %v349 = vpack.c.b16 %v237, %v233
  %v350 = vpack.c.b16 %v238, %v234
  %v351 = vpack.c.b16 %v239, %v235
  %v352 = vpack.c.b16 %v240, %v236
  %v353 = vpack.c.b16 %v245, %v241
  %v354 = vpack.c.b16 %v246, %v242
  %v355 = vpack.c.b16 %v247, %v243
  %v356 = vpack.c.b16 %v248, %v244
  %v357 = vpack.c.b16 %v253, %v249
  %v358 = vpack.c.b16 %v254, %v250
  %v359 = vpack.c.b16 %v255, %v251
  %v360 = vpack.c.b16 %v256, %v252
  %v361 = vpack.c.b16 %v261, %v257
  %v362 = vpack.c.b16 %v262, %v258
  %v363 = vpack.c.b16 %v263, %v259
  %v364 = vpack.c.b16 %v264, %v260
  %v365 = vpack.c.b16 %v269, %v265
  %v366 = vpack.c.b16 %v270, %v266
  %v367 = vpack.c.b16 %v271, %v267
  %v368 = vpack.c.b16 %v272, %v268
  %v369 = vpack.c.b16 %v277, %v273
  %v370 = vpack.c.b16 %v278, %v274
  %v371 = vpack.c.b16 %v279, %v275
  %v372 = vpack.c.b16 %v280, %v276
  %v373 = vpack.c.b16 %v285, %v281
  %v374 = vpack.c.b16 %v286, %v282
  %v375 = vpack.c.b16 %v287, %v283
  %v376 = vpack.c.b16 %v288, %v284
  %v377 = vpack.c.b16 %v293, %v289
  %v378 = vpack.c.b16 %v294, %v290
  %v379 = vpack.c.b16 %v295, %v291
  %v380 = vpack.c.b16 %v296, %v292
  %v381 = vpack.c.b16 %v301, %v297
  %v382 = vpack.c.b16 %v302, %v298
  %v383 = vpack.c.b16 %v303, %v299
  %v384 = vpack.c.b16 %v304, %v300
  %v385 = vpack.c.b16 %v309, %v305
  %v386 = vpack.c.b16 %v310, %v306
  %v387 = vpack.c.b16 %v311, %v307
  %v388 = vpack.c.b16 %v312, %v308
  %v389 = vpack.c.b16 %v317, %v313
  %v390 = vpack.c.b16 %v318, %v314
  %v391 = vpack.c.b16 %v319, %v315
  %v392 = vpack.c.b16 %v320, %v316
  %v393 = vpack.c.b16 %v325, %v321
  %v394 = vpack.c.b16 %v326, %v322
  %v395 = vpack.c.b16 %v327, %v323
  %v396 = vpack.c.b16 %v328, %v324
  %v397 = vpack.c.b16 %v333, %v329
  %v398 = vpack.c.b16 %v334, %v330
  %v399 = vpack.c.b16 %v335, %v331
  %v400 = vpack.c.b16 %v336, %v332
  %465 = vmatprep.subr.bf16.mxu0 %v338
  %466 = vmatpush1.bf16.msra.mxu0 %v337
  %467 = vmatprep.subr.bf16.mxu0 %v342
  %468 = vmatpush1.bf16.msra.mxu0 %v341
  %469 = vmatprep.subr.bf16.mxu0 %v346
  %470 = vmatpush1.bf16.msra.mxu0 %v345
  %471 = vmatprep.subr.bf16.mxu0 %v350
  %472 = vmatpush1.bf16.msra.mxu0 %v349
  %473 = vmatprep.subr.bf16.mxu0 %v354
  %474 = vmatpush1.bf16.msra.mxu0 %v353
  %475 = vmatprep.subr.bf16.mxu0 %v358
  %476 = vmatpush1.bf16.msra.mxu0 %v357
  %477 = vmatprep.subr.bf16.mxu0 %v362
  %478 = vmatpush1.bf16.msra.mxu0 %v361
  %479 = vmatprep.subr.bf16.mxu0 %v366
  %480 = vmatpush1.bf16.msra.mxu0 %v365
  %481 = vmatprep.subr.bf16.mxu0 %v370
  %482 = vmatpush1.bf16.msra.mxu0 %v369
  %483 = vmatprep.subr.bf16.mxu0 %v374
  %484 = vmatpush1.bf16.msra.mxu0 %v373
  %485 = vmatprep.subr.bf16.mxu0 %v378
  %486 = vmatpush1.bf16.msra.mxu0 %v377
  %487 = vmatprep.subr.bf16.mxu0 %v382
  %488 = vmatpush1.bf16.msra.mxu0 %v381
  %489 = vmatprep.subr.bf16.mxu0 %v386
  %490 = vmatpush1.bf16.msra.mxu0 %v385
  %491 = vmatprep.subr.bf16.mxu0 %v390
  %492 = vmatpush1.bf16.msra.mxu0 %v389
  %493 = vmatprep.subr.bf16.mxu0 %v394
  %494 = vmatpush1.bf16.msra.mxu0 %v393
  %495 = vmatprep.subr.bf16.mxu0 %v398
  %496 = vmatpush1.bf16.msra.mxu0 %v397
  %497 = vmatprep.mubr.bf16.mxu0 %v138
  %498 = vmatmul.mubr.bf16.gmra.mrb[0].mxu0 %v137
  %v499 = vpop.f32.mrb[0].mxu0
  %v500 = vadd.f32 %v108, %v499
  %v501 = vpop.f32.mrb[0].mxu0
  %v502 = vadd.f32 %v112, %v501
  %v503 = vpop.f32.mrb[0].mxu0
  %v504 = vadd.f32 %v108, %v503
  %v505 = vpop.f32.mrb[0].mxu0
  %v506 = vadd.f32 %v112, %v505
  %507 = vmatprep.mubr.bf16.mxu0 %v140
  %508 = vmatmul.mubr.bf16.gmra.mrb[0].mxu0 %v139
  %v509 = vpop.f32.mrb[0].mxu0
  %v510 = vadd.f32 %v108, %v509
  %v511 = vpop.f32.mrb[0].mxu0
  %v512 = vadd.f32 %v112, %v511
  %v513 = vpop.f32.mrb[0].mxu0
  %v514 = vadd.f32 %v108, %v513
  %v515 = vpop.f32.mrb[0].mxu0
  %v516 = vadd.f32 %v112, %v515
  %517 = vdwg.mxu0
  %518 = vmatprep.subr.bf16.mxu0 %v340
  %519 = vmatpush1.bf16.msra.mxu0 %v339
  %520 = vmatprep.subr.bf16.mxu0 %v344
  %521 = vmatpush1.bf16.msra.mxu0 %v343
  %522 = vmatprep.subr.bf16.mxu0 %v348
  %523 = vmatpush1.bf16.msra.mxu0 %v347
  %524 = vmatprep.subr.bf16.mxu0 %v352
  %525 = vmatpush1.bf16.msra.mxu0 %v351
  %526 = vmatprep.subr.bf16.mxu0 %v356
  %527 = vmatpush1.bf16.msra.mxu0 %v355
  %528 = vmatprep.subr.bf16.mxu0 %v360
  %529 = vmatpush1.bf16.msra.mxu0 %v359
  %530 = vmatprep.subr.bf16.mxu0 %v364
  %531 = vmatpush1.bf16.msra.mxu0 %v363
  %532 = vmatprep.subr.bf16.mxu0 %v368
  %533 = vmatpush1.bf16.msra.mxu0 %v367
  %534 = vmatprep.subr.bf16.mxu0 %v372
  %535 = vmatpush1.bf16.msra.mxu0 %v371
  %536 = vmatprep.subr.bf16.mxu0 %v376
  %537 = vmatpush1.bf16.msra.mxu0 %v375
  %538 = vmatprep.subr.bf16.mxu0 %v380
  %539 = vmatpush1.bf16.msra.mxu0 %v379
  %540 = vmatprep.subr.bf16.mxu0 %v384
  %541 = vmatpush1.bf16.msra.mxu0 %v383
  %542 = vmatprep.subr.bf16.mxu0 %v388
  %543 = vmatpush1.bf16.msra.mxu0 %v387
  %544 = vmatprep.subr.bf16.mxu0 %v392
  %545 = vmatpush1.bf16.msra.mxu0 %v391
  %546 = vmatprep.subr.bf16.mxu0 %v396
  %547 = vmatpush1.bf16.msra.mxu0 %v395
  %548 = vmatprep.subr.bf16.mxu0 %v400
  %549 = vmatpush1.bf16.msra.mxu0 %v399
  %550 = vmatprep.mubr.bf16.mxu0 %v138
  %551 = vmatmul.mubr.bf16.gmra.mrb[0].mxu0 %v137
  %v552 = vpop.f32.mrb[0].mxu0
  %v553 = vadd.f32 %v116, %v552
  %v554 = vpop.f32.mrb[0].mxu0
  %v555 = vadd.f32 %v120, %v554
  %v556 = vpop.f32.mrb[0].mxu0
  %v557 = vadd.f32 %v116, %v556
  %v558 = vpop.f32.mrb[0].mxu0
  %v559 = vadd.f32 %v120, %v558
  %560 = vmatprep.mubr.bf16.mxu0 %v140
  %561 = vmatmul.mubr.bf16.gmra.mrb[0].mxu0 %v139
  %v562 = vpop.f32.mrb[0].mxu0
  %v563 = vadd.f32 %v116, %v562
  %v564 = vpop.f32.mrb[0].mxu0
  %v565 = vadd.f32 %v120, %v564
  %v566 = vpop.f32.mrb[0].mxu0
  %v567 = vadd.f32 %v116, %v566
  %v568 = vpop.f32.mrb[0].mxu0
  %v569 = vadd.f32 %v120, %v568
  %570 = vdwg.mxu0
  %v571 = vmax.f32 %v500, 0.0
  %v572 = vmax.f32 %v502, 0.0
  %v573 = vmax.f32 %v553, 0.0
  %v574 = vmax.f32 %v555, 0.0
  %v575 = vmax.f32 %v504, 0.0
  %v576 = vmax.f32 %v506, 0.0
  %v577 = vmax.f32 %v557, 0.0
  %v578 = vmax.f32 %v559, 0.0
  %v579 = vmax.f32 %v510, 0.0
  %v580 = vmax.f32 %v512, 0.0
  %v581 = vmax.f32 %v563, 0.0
  %v582 = vmax.f32 %v565, 0.0
  %v583 = vmax.f32 %v514, 0.0
  %v584 = vmax.f32 %v516, 0.0
  %v585 = vmax.f32 %v567, 0.0
  %v586 = vmax.f32 %v569, 0.0
  %v587 = vpack.c.bf16 %v575, %v571
  %v588 = vpack.c.bf16 %v576, %v572
  %v589 = vpack.c.bf16 %v577, %v573
  %v590 = vpack.c.bf16 %v578, %v574
  %v591 = vpack.c.bf16 %v583, %v579
  %v592 = vpack.c.bf16 %v584, %v580
  %v593 = vpack.c.bf16 %v585, %v581
  %v594 = vpack.c.bf16 %v586, %v582
  %v595 = vld [vmem:[%s3] sm:$0xff]
  %v596 = vld [vmem:[%s3 + $0x8] sm:$0xff]
  %v597 = vld [vmem:[%s3 + $0x10] sm:$0xff]
  %v598 = vld [vmem:[%s3 + $0x18] sm:$0xff]
  %v599 = vld [vmem:[%s3 + $0x20] sm:$0xff]
  %v600 = vld [vmem:[%s3 + $0x28] sm:$0xff]
  %v601 = vld [vmem:[%s3 + $0x30] sm:$0xff]
  %v602 = vld [vmem:[%s3 + $0x38] sm:$0xff]
  %v603 = vld [vmem:[%s3 + $0x40] sm:$0xff]
  %v604 = vld [vmem:[%s3 + $0x48] sm:$0xff]
  %v605 = vld [vmem:[%s3 + $0x50] sm:$0xff]
  %v606 = vld [vmem:[%s3 + $0x58] sm:$0xff]
  %v607 = vld [vmem:[%s3 + $0x60] sm:$0xff]
  %v608 = vld [vmem:[%s3 + $0x68] sm:$0xff]
  %v609 = vld [vmem:[%s3 + $0x70] sm:$0xff]
  %v610 = vld [vmem:[%s3 + $0x78] sm:$0xff]
  %v611 = vld [vmem:[%s3 + $0x80] sm:$0xff]
  %v612 = vld [vmem:[%s3 + $0x88] sm:$0xff]
  %v613 = vld [vmem:[%s3 + $0x90] sm:$0xff]
  %v614 = vld [vmem:[%s3 + $0x98] sm:$0xff]
  %v615 = vld [vmem:[%s3 + $0xa0] sm:$0xff]
  %v616 = vld [vmem:[%s3 + $0xa8] sm:$0xff]
  %v617 = vld [vmem:[%s3 + $0xb0] sm:$0xff]
  %v618 = vld [vmem:[%s3 + $0xb8] sm:$0xff]
  %v619 = vld [vmem:[%s3 + $0xc0] sm:$0xff]
  %v620 = vld [vmem:[%s3 + $0xc8] sm:$0xff]
  %v621 = vld [vmem:[%s3 + $0xd0] sm:$0xff]
  %v622 = vld [vmem:[%s3 + $0xd8] sm:$0xff]
  %v623 = vld [vmem:[%s3 + $0xe0] sm:$0xff]
  %v624 = vld [vmem:[%s3 + $0xe8] sm:$0xff]
  %v625 = vld [vmem:[%s3 + $0xf0] sm:$0xff]
  %v626 = vld [vmem:[%s3 + $0xf8] sm:$0xff]
  %v627 = vld [vmem:[%s3 + $0x100] sm:$0xff]
  %v628 = vld [vmem:[%s3 + $0x108] sm:$0xff]
  %v629 = vld [vmem:[%s3 + $0x110] sm:$0xff]
  %v630 = vld [vmem:[%s3 + $0x118] sm:$0xff]
  %v631 = vld [vmem:[%s3 + $0x120] sm:$0xff]
  %v632 = vld [vmem:[%s3 + $0x128] sm:$0xff]
  %v633 = vld [vmem:[%s3 + $0x130] sm:$0xff]
  %v634 = vld [vmem:[%s3 + $0x138] sm:$0xff]
  %v635 = vld [vmem:[%s3 + $0x140] sm:$0xff]
  %v636 = vld [vmem:[%s3 + $0x148] sm:$0xff]
  %v637 = vld [vmem:[%s3 + $0x150] sm:$0xff]
  %v638 = vld [vmem:[%s3 + $0x158] sm:$0xff]
  %v639 = vld [vmem:[%s3 + $0x160] sm:$0xff]
  %v640 = vld [vmem:[%s3 + $0x168] sm:$0xff]
  %v641 = vld [vmem:[%s3 + $0x170] sm:$0xff]
  %v642 = vld [vmem:[%s3 + $0x178] sm:$0xff]
  %v643 = vld [vmem:[%s3 + $0x180] sm:$0xff]
  %v644 = vld [vmem:[%s3 + $0x188] sm:$0xff]
  %v645 = vld [vmem:[%s3 + $0x190] sm:$0xff]
  %v646 = vld [vmem:[%s3 + $0x198] sm:$0xff]
  %v647 = vld [vmem:[%s3 + $0x1a0] sm:$0xff]
  %v648 = vld [vmem:[%s3 + $0x1a8] sm:$0xff]
  %v649 = vld [vmem:[%s3 + $0x1b0] sm:$0xff]
  %v650 = vld [vmem:[%s3 + $0x1b8] sm:$0xff]
  %v651 = vld [vmem:[%s3 + $0x1c0] sm:$0xff]
  %v652 = vld [vmem:[%s3 + $0x1c8] sm:$0xff]
  %v653 = vld [vmem:[%s3 + $0x1d0] sm:$0xff]
  %v654 = vld [vmem:[%s3 + $0x1d8] sm:$0xff]
  %v655 = vld [vmem:[%s3 + $0x1e0] sm:$0xff]
  %v656 = vld [vmem:[%s3 + $0x1e8] sm:$0xff]
  %v657 = vld [vmem:[%s3 + $0x1f0] sm:$0xff]
  %v658 = vld [vmem:[%s3 + $0x1f8] sm:$0xff]
  %v659 = vld [vmem:[%s4] sm:$0x3]
  %v661 = vlaneseq
  %v662 = vshrl.u32 %v661, 7
  %v663 = vsub.s32 0, %v662
  %v664 = vrot.slane %v659, %v663
  %v665 = vlaneseq
  %v666 = vshrl.u32 %v665, 7
  %v667 = vsub.s32 1, %v666
  %v668 = vrot.slane %v659, %v667
  %v735 = vunpack.c.l.b16 %v595
  %v736 = vunpack.c.h.b16 %v595
  %v737 = vunpack.c.l.b16 %v596
  %v738 = vunpack.c.h.b16 %v596
  %v739 = vunpack.c.l.b16 %v597
  %v740 = vunpack.c.h.b16 %v597
  %v741 = vunpack.c.l.b16 %v598
  %v742 = vunpack.c.h.b16 %v598
  %v743 = vunpack.c.l.b16 %v599
  %v744 = vunpack.c.h.b16 %v599
  %v745 = vunpack.c.l.b16 %v600
  %v746 = vunpack.c.h.b16 %v600
  %v747 = vunpack.c.l.b16 %v601
  %v748 = vunpack.c.h.b16 %v601
  %v749 = vunpack.c.l.b16 %v602
  %v750 = vunpack.c.h.b16 %v602
  %v751 = vunpack.c.l.b16 %v603
  %v752 = vunpack.c.h.b16 %v603
  %v753 = vunpack.c.l.b16 %v604
  %v754 = vunpack.c.h.b16 %v604
  %v755 = vunpack.c.l.b16 %v605
  %v756 = vunpack.c.h.b16 %v605
  %v757 = vunpack.c.l.b16 %v606
  %v758 = vunpack.c.h.b16 %v606
  %v759 = vunpack.c.l.b16 %v607
  %v760 = vunpack.c.h.b16 %v607
  %v761 = vunpack.c.l.b16 %v608
  %v762 = vunpack.c.h.b16 %v608
  %v763 = vunpack.c.l.b16 %v609
  %v764 = vunpack.c.h.b16 %v609
  %v765 = vunpack.c.l.b16 %v610
  %v766 = vunpack.c.h.b16 %v610
  %v767 = vunpack.c.l.b16 %v611
  %v768 = vunpack.c.h.b16 %v611
  %v769 = vunpack.c.l.b16 %v612
  %v770 = vunpack.c.h.b16 %v612
  %v771 = vunpack.c.l.b16 %v613
  %v772 = vunpack.c.h.b16 %v613
  %v773 = vunpack.c.l.b16 %v614
  %v774 = vunpack.c.h.b16 %v614
  %v775 = vunpack.c.l.b16 %v615
  %v776 = vunpack.c.h.b16 %v615
  %v777 = vunpack.c.l.b16 %v616
  %v778 = vunpack.c.h.b16 %v616
  %v779 = vunpack.c.l.b16 %v617
  %v780 = vunpack.c.h.b16 %v617
  %v781 = vunpack.c.l.b16 %v618
  %v782 = vunpack.c.h.b16 %v618
  %v783 = vunpack.c.l.b16 %v619
  %v784 = vunpack.c.h.b16 %v619
  %v785 = vunpack.c.l.b16 %v620
  %v786 = vunpack.c.h.b16 %v620
  %v787 = vunpack.c.l.b16 %v621
  %v788 = vunpack.c.h.b16 %v621
  %v789 = vunpack.c.l.b16 %v622
  %v790 = vunpack.c.h.b16 %v622
  %v791 = vunpack.c.l.b16 %v623
  %v792 = vunpack.c.h.b16 %v623
  %v793 = vunpack.c.l.b16 %v624
  %v794 = vunpack.c.h.b16 %v624
  %v795 = vunpack.c.l.b16 %v625
  %v796 = vunpack.c.h.b16 %v625
  %v797 = vunpack.c.l.b16 %v626
  %v798 = vunpack.c.h.b16 %v626
  %v799 = vunpack.c.l.b16 %v627
  %v800 = vunpack.c.h.b16 %v627
  %v801 = vunpack.c.l.b16 %v628
  %v802 = vunpack.c.h.b16 %v628
  %v803 = vunpack.c.l.b16 %v629
  %v804 = vunpack.c.h.b16 %v629
  %v805 = vunpack.c.l.b16 %v630
  %v806 = vunpack.c.h.b16 %v630
  %v807 = vunpack.c.l.b16 %v631
  %v808 = vunpack.c.h.b16 %v631
  %v809 = vunpack.c.l.b16 %v632
  %v810 = vunpack.c.h.b16 %v632
  %v811 = vunpack.c.l.b16 %v633
  %v812 = vunpack.c.h.b16 %v633
  %v813 = vunpack.c.l.b16 %v634
  %v814 = vunpack.c.h.b16 %v634
  %v815 = vunpack.c.l.b16 %v635
  %v816 = vunpack.c.h.b16 %v635
  %v817 = vunpack.c.l.b16 %v636
  %v818 = vunpack.c.h.b16 %v636
  %v819 = vunpack.c.l.b16 %v637
  %v820 = vunpack.c.h.b16 %v637
  %v821 = vunpack.c.l.b16 %v638
  %v822 = vunpack.c.h.b16 %v638
  %v823 = vunpack.c.l.b16 %v639
  %v824 = vunpack.c.h.b16 %v639
  %v825 = vunpack.c.l.b16 %v640
  %v826 = vunpack.c.h.b16 %v640
  %v827 = vunpack.c.l.b16 %v641
  %v828 = vunpack.c.h.b16 %v641
  %v829 = vunpack.c.l.b16 %v642
  %v830 = vunpack.c.h.b16 %v642
  %v831 = vunpack.c.l.b16 %v643
  %v832 = vunpack.c.h.b16 %v643
  %v833 = vunpack.c.l.b16 %v644
  %v834 = vunpack.c.h.b16 %v644
  %v835 = vunpack.c.l.b16 %v645
  %v836 = vunpack.c.h.b16 %v645
  %v837 = vunpack.c.l.b16 %v646
  %v838 = vunpack.c.h.b16 %v646
  %v839 = vunpack.c.l.b16 %v647
  %v840 = vunpack.c.h.b16 %v647
  %v841 = vunpack.c.l.b16 %v648
  %v842 = vunpack.c.h.b16 %v648
  %v843 = vunpack.c.l.b16 %v649
  %v844 = vunpack.c.h.b16 %v649
  %v845 = vunpack.c.l.b16 %v650
  %v846 = vunpack.c.h.b16 %v650
  %v847 = vunpack.c.l.b16 %v651
  %v848 = vunpack.c.h.b16 %v651
  %v849 = vunpack.c.l.b16 %v652
  %v850 = vunpack.c.h.b16 %v652
  %v851 = vunpack.c.l.b16 %v653
  %v852 = vunpack.c.h.b16 %v653
  %v853 = vunpack.c.l.b16 %v654
  %v854 = vunpack.c.h.b16 %v654
  %v855 = vunpack.c.l.b16 %v655
  %v856 = vunpack.c.h.b16 %v655
  %v857 = vunpack.c.l.b16 %v656
  %v858 = vunpack.c.h.b16 %v656
  %v859 = vunpack.c.l.b16 %v657
  %v860 = vunpack.c.h.b16 %v657
  %v861 = vunpack.c.l.b16 %v658
  %v862 = vunpack.c.h.b16 %v658
  %v863 = vpack.c.b16 %v737, %v735
  %v864 = vpack.c.b16 %v738, %v736
  %v865 = vpack.c.b16 %v741, %v739
  %v866 = vpack.c.b16 %v742, %v740
  %v867 = vpack.c.b16 %v745, %v743
  %v868 = vpack.c.b16 %v746, %v744
  %v869 = vpack.c.b16 %v749, %v747
  %v870 = vpack.c.b16 %v750, %v748
  %v871 = vpack.c.b16 %v753, %v751
  %v872 = vpack.c.b16 %v754, %v752
  %v873 = vpack.c.b16 %v757, %v755
  %v874 = vpack.c.b16 %v758, %v756
  %v875 = vpack.c.b16 %v761, %v759
  %v876 = vpack.c.b16 %v762, %v760
  %v877 = vpack.c.b16 %v765, %v763
  %v878 = vpack.c.b16 %v766, %v764
  %v879 = vpack.c.b16 %v769, %v767
  %v880 = vpack.c.b16 %v770, %v768
  %v881 = vpack.c.b16 %v773, %v771
  %v882 = vpack.c.b16 %v774, %v772
  %v883 = vpack.c.b16 %v777, %v775
  %v884 = vpack.c.b16 %v778, %v776
  %v885 = vpack.c.b16 %v781, %v779
  %v886 = vpack.c.b16 %v782, %v780
  %v887 = vpack.c.b16 %v785, %v783
  %v888 = vpack.c.b16 %v786, %v784
  %v889 = vpack.c.b16 %v789, %v787
  %v890 = vpack.c.b16 %v790, %v788
  %v891 = vpack.c.b16 %v793, %v791
  %v892 = vpack.c.b16 %v794, %v792
  %v893 = vpack.c.b16 %v797, %v795
  %v894 = vpack.c.b16 %v798, %v796
  %v895 = vpack.c.b16 %v801, %v799
  %v896 = vpack.c.b16 %v802, %v800
  %v897 = vpack.c.b16 %v805, %v803
  %v898 = vpack.c.b16 %v806, %v804
  %v899 = vpack.c.b16 %v809, %v807
  %v900 = vpack.c.b16 %v810, %v808
  %v901 = vpack.c.b16 %v813, %v811
  %v902 = vpack.c.b16 %v814, %v812
  %v903 = vpack.c.b16 %v817, %v815
  %v904 = vpack.c.b16 %v818, %v816
  %v905 = vpack.c.b16 %v821, %v819
  %v906 = vpack.c.b16 %v822, %v820
  %v907 = vpack.c.b16 %v825, %v823
  %v908 = vpack.c.b16 %v826, %v824
  %v909 = vpack.c.b16 %v829, %v827
  %v910 = vpack.c.b16 %v830, %v828
  %v911 = vpack.c.b16 %v833, %v831
  %v912 = vpack.c.b16 %v834, %v832
  %v913 = vpack.c.b16 %v837, %v835
  %v914 = vpack.c.b16 %v838, %v836
  %v915 = vpack.c.b16 %v841, %v839
  %v916 = vpack.c.b16 %v842, %v840
  %v917 = vpack.c.b16 %v845, %v843
  %v918 = vpack.c.b16 %v846, %v844
  %v919 = vpack.c.b16 %v849, %v847
  %v920 = vpack.c.b16 %v850, %v848
  %v921 = vpack.c.b16 %v853, %v851
  %v922 = vpack.c.b16 %v854, %v852
  %v923 = vpack.c.b16 %v857, %v855
  %v924 = vpack.c.b16 %v858, %v856
  %v925 = vpack.c.b16 %v861, %v859
  %v926 = vpack.c.b16 %v862, %v860
  %991 = vmatprep.subr.bf16.mxu0 %v864
  %992 = vmatpush1.bf16.msra.mxu0 %v863
  %993 = vmatprep.subr.bf16.mxu0 %v866
  %994 = vmatpush1.bf16.msra.mxu0 %v865
  %995 = vmatprep.subr.bf16.mxu0 %v868
  %996 = vmatpush1.bf16.msra.mxu0 %v867
  %997 = vmatprep.subr.bf16.mxu0 %v870
  %998 = vmatpush1.bf16.msra.mxu0 %v869
  %999 = vmatprep.subr.bf16.mxu0 %v872
  %1000 = vmatpush1.bf16.msra.mxu0 %v871
  %1001 = vmatprep.subr.bf16.mxu0 %v874
  %1002 = vmatpush1.bf16.msra.mxu0 %v873
  %1003 = vmatprep.subr.bf16.mxu0 %v876
  %1004 = vmatpush1.bf16.msra.mxu0 %v875
  %1005 = vmatprep.subr.bf16.mxu0 %v878
  %1006 = vmatpush1.bf16.msra.mxu0 %v877
  %1007 = vmatprep.subr.bf16.mxu0 %v880
  %1008 = vmatpush1.bf16.msra.mxu0 %v879
  %1009 = vmatprep.subr.bf16.mxu0 %v882
  %1010 = vmatpush1.bf16.msra.mxu0 %v881
  %1011 = vmatprep.subr.bf16.mxu0 %v884
  %1012 = vmatpush1.bf16.msra.mxu0 %v883
  %1013 = vmatprep.subr.bf16.mxu0 %v886
  %1014 = vmatpush1.bf16.msra.mxu0 %v885
  %1015 = vmatprep.subr.bf16.mxu0 %v888
  %1016 = vmatpush1.bf16.msra.mxu0 %v887
  %1017 = vmatprep.subr.bf16.mxu0 %v890
  %1018 = vmatpush1.bf16.msra.mxu0 %v889
  %1019 = vmatprep.subr.bf16.mxu0 %v892
  %1020 = vmatpush1.bf16.msra.mxu0 %v891
  %1021 = vmatprep.subr.bf16.mxu0 %v894
  %1022 = vmatpush1.bf16.msra.mxu0 %v893
  %1023 = vmatprep.mubr.bf16.mxu0 %v588
  %1024 = vmatmul.mubr.bf16.gmra.mrb[0].mxu0 %v587
  %v1025 = vpop.f32.mrb[0].mxu0
  %v1026 = vadd.f32 %v664, %v1025
  %v1027 = vpop.f32.mrb[0].mxu0
  %v1028 = vadd.f32 %v668, %v1027
  %v1029 = vpop.f32.mrb[0].mxu0
  %v1030 = vadd.f32 %v664, %v1029
  %v1031 = vpop.f32.mrb[0].mxu0
  %v1032 = vadd.f32 %v668, %v1031
  %1033 = vmatprep.mubr.bf16.mxu0 %v592
  %1034 = vmatmul.mubr.bf16.gmra.mrb[0].mxu0 %v591
  %v1035 = vpop.f32.mrb[0].mxu0
  %v1036 = vadd.f32 %v664, %v1035
  %v1037 = vpop.f32.mrb[0].mxu0
  %v1038 = vadd.f32 %v668, %v1037
  %v1039 = vpop.f32.mrb[0].mxu0
  %v1040 = vadd.f32 %v664, %v1039
  %v1041 = vpop.f32.mrb[0].mxu0
  %v1042 = vadd.f32 %v668, %v1041
  %1043 = vdwg.mxu0
  %1044 = vmatprep.subr.bf16.mxu0 %v896
  %1045 = vmatpush1.bf16.msra.mxu0 %v895
  %1046 = vmatprep.subr.bf16.mxu0 %v898
  %1047 = vmatpush1.bf16.msra.mxu0 %v897
  %1048 = vmatprep.subr.bf16.mxu0 %v900
  %1049 = vmatpush1.bf16.msra.mxu0 %v899
  %1050 = vmatprep.subr.bf16.mxu0 %v902
  %1051 = vmatpush1.bf16.msra.mxu0 %v901
  %1052 = vmatprep.subr.bf16.mxu0 %v904
  %1053 = vmatpush1.bf16.msra.mxu0 %v903
  %1054 = vmatprep.subr.bf16.mxu0 %v906
  %1055 = vmatpush1.bf16.msra.mxu0 %v905
  %1056 = vmatprep.subr.bf16.mxu0 %v908
  %1057 = vmatpush1.bf16.msra.mxu0 %v907
  %1058 = vmatprep.subr.bf16.mxu0 %v910
  %1059 = vmatpush1.bf16.msra.mxu0 %v909
  %1060 = vmatprep.subr.bf16.mxu0 %v912
  %1061 = vmatpush1.bf16.msra.mxu0 %v911
  %1062 = vmatprep.subr.bf16.mxu0 %v914
  %1063 = vmatpush1.bf16.msra.mxu0 %v913
  %1064 = vmatprep.subr.bf16.mxu0 %v916
  %1065 = vmatpush1.bf16.msra.mxu0 %v915
  %1066 = vmatprep.subr.bf16.mxu0 %v918
  %1067 = vmatpush1.bf16.msra.mxu0 %v917
  %1068 = vmatprep.subr.bf16.mxu0 %v920
  %1069 = vmatpush1.bf16.msra.mxu0 %v919
  %1070 = vmatprep.subr.bf16.mxu0 %v922
  %1071 = vmatpush1.bf16.msra.mxu0 %v921
  %1072 = vmatprep.subr.bf16.mxu0 %v924
  %1073 = vmatpush1.bf16.msra.mxu0 %v923
  %1074 = vmatprep.subr.bf16.mxu0 %v926
  %1075 = vmatpush1.bf16.msra.mxu0 %v925
  %1076 = vmatprep.mubr.bf16.mxu0 %v590
  %1077 = vmatmul.mubr.bf16.gmra.mrb[0].mxu0 %v589
  %v1078 = vpop.f32.mrb[0].mxu0
  %v1079 = vadd.f32 %v1026, %v1078
  %v1080 = vpop.f32.mrb[0].mxu0
  %v1081 = vadd.f32 %v1028, %v1080
  %v1082 = vpop.f32.mrb[0].mxu0
  %v1083 = vadd.f32 %v1030, %v1082
  %v1084 = vpop.f32.mrb[0].mxu0
  %v1085 = vadd.f32 %v1032, %v1084
  %1086 = vmatprep.mubr.bf16.mxu0 %v594
  %1087 = vmatmul.mubr.bf16.gmra.mrb[0].mxu0 %v593
  %v1088 = vpop.f32.mrb[0].mxu0
  %v1089 = vadd.f32 %v1036, %v1088
  %v1090 = vpop.f32.mrb[0].mxu0
  %v1091 = vadd.f32 %v1038, %v1090
  %v1092 = vpop.f32.mrb[0].mxu0
  %v1093 = vadd.f32 %v1040, %v1092
  %v1094 = vpop.f32.mrb[0].mxu0
  %v1095 = vadd.f32 %v1042, %v1094
  %1096 = vdwg.mxu0
  %v1097 = vmax.f32 %v1079, 0.0
  %v1098 = vmax.f32 %v1081, 0.0
  %v1099 = vmax.f32 %v1083, 0.0
  %v1100 = vmax.f32 %v1085, 0.0
  %v1101 = vmax.f32 %v1089, 0.0
  %v1102 = vmax.f32 %v1091, 0.0
  %v1103 = vmax.f32 %v1093, 0.0
  %v1104 = vmax.f32 %v1095, 0.0
  %1105 = vst [vmem:[%s9] sm:$0xff] %v1097
  %1106 = vst [vmem:[%s9 + $0x8] sm:$0xff] %v1098
  %1107 = vst [vmem:[%s9 + $0x10] sm:$0xff] %v1099
  %1108 = vst [vmem:[%s9 + $0x18] sm:$0xff] %v1100
  %1109 = vst [vmem:[%s9 + $0x20] sm:$0xff] %v1101
  %1110 = vst [vmem:[%s9 + $0x28] sm:$0xff] %v1102
  %1111 = vst [vmem:[%s9 + $0x30] sm:$0xff] %v1103
  %1112 = vst [vmem:[%s9 + $0x38] sm:$0xff] %v1104
  %v1113 = vpack.c.bf16 %v1099, %v1097
  %v1114 = vpack.c.bf16 %v1100, %v1098
  %v1115 = vpack.c.bf16 %v1103, %v1101
  %v1116 = vpack.c.bf16 %v1104, %v1102
  %v1117 = vld [vmem:[%s5] sm:$0xff]
  %v1118 = vld [vmem:[%s5 + $0x8] sm:$0xff]
  %v1119 = vld [vmem:[%s5 + $0x10] sm:$0xff]
  %v1120 = vld [vmem:[%s5 + $0x18] sm:$0xff]
  %v1121 = vld [vmem:[%s5 + $0x20] sm:$0xff]
  %v1122 = vld [vmem:[%s5 + $0x28] sm:$0xff]
  %v1123 = vld [vmem:[%s5 + $0x30] sm:$0xff]
  %v1124 = vld [vmem:[%s5 + $0x38] sm:$0xff]
  %v1125 = vld [vmem:[%s5 + $0x40] sm:$0xff]
  %v1126 = vld [vmem:[%s5 + $0x48] sm:$0xff]
  %v1127 = vld [vmem:[%s5 + $0x50] sm:$0xff]
  %v1128 = vld [vmem:[%s5 + $0x58] sm:$0xff]
  %v1129 = vld [vmem:[%s5 + $0x60] sm:$0xff]
  %v1130 = vld [vmem:[%s5 + $0x68] sm:$0xff]
  %v1131 = vld [vmem:[%s5 + $0x70] sm:$0xff]
  %v1132 = vld [vmem:[%s5 + $0x78] sm:$0xff]
  %v1133 = vld [vmem:[%s5 + $0x80] sm:$0xff]
  %v1134 = vld [vmem:[%s5 + $0x88] sm:$0xff]
  %v1135 = vld [vmem:[%s5 + $0x90] sm:$0xff]
  %v1136 = vld [vmem:[%s5 + $0x98] sm:$0xff]
  %v1137 = vld [vmem:[%s5 + $0xa0] sm:$0xff]
  %v1138 = vld [vmem:[%s5 + $0xa8] sm:$0xff]
  %v1139 = vld [vmem:[%s5 + $0xb0] sm:$0xff]
  %v1140 = vld [vmem:[%s5 + $0xb8] sm:$0xff]
  %v1141 = vld [vmem:[%s5 + $0xc0] sm:$0xff]
  %v1142 = vld [vmem:[%s5 + $0xc8] sm:$0xff]
  %v1143 = vld [vmem:[%s5 + $0xd0] sm:$0xff]
  %v1144 = vld [vmem:[%s5 + $0xd8] sm:$0xff]
  %v1145 = vld [vmem:[%s5 + $0xe0] sm:$0xff]
  %v1146 = vld [vmem:[%s5 + $0xe8] sm:$0xff]
  %v1147 = vld [vmem:[%s5 + $0xf0] sm:$0xff]
  %v1148 = vld [vmem:[%s5 + $0xf8] sm:$0xff]
  %v1149 = vld [vmem:[%s6] sm:$0x3]
  %v1151 = vlaneseq
  %v1152 = vshrl.u32 %v1151, 7
  %v1153 = vsub.s32 0, %v1152
  %v1154 = vrot.slane %v1149, %v1153
  %v1155 = vlaneseq
  %v1156 = vshrl.u32 %v1155, 7
  %v1157 = vsub.s32 1, %v1156
  %v1158 = vrot.slane %v1149, %v1157
  %v1193 = vunpack.c.l.b16 %v1117
  %v1194 = vunpack.c.h.b16 %v1117
  %v1195 = vunpack.c.l.b16 %v1118
  %v1196 = vunpack.c.h.b16 %v1118
  %v1197 = vunpack.c.l.b16 %v1119
  %v1198 = vunpack.c.h.b16 %v1119
  %v1199 = vunpack.c.l.b16 %v1120
  %v1200 = vunpack.c.h.b16 %v1120
  %v1201 = vunpack.c.l.b16 %v1121
  %v1202 = vunpack.c.h.b16 %v1121
  %v1203 = vunpack.c.l.b16 %v1122
  %v1204 = vunpack.c.h.b16 %v1122
  %v1205 = vunpack.c.l.b16 %v1123
  %v1206 = vunpack.c.h.b16 %v1123
  %v1207 = vunpack.c.l.b16 %v1124
  %v1208 = vunpack.c.h.b16 %v1124
  %v1209 = vunpack.c.l.b16 %v1125
  %v1210 = vunpack.c.h.b16 %v1125
  %v1211 = vunpack.c.l.b16 %v1126
  %v1212 = vunpack.c.h.b16 %v1126
  %v1213 = vunpack.c.l.b16 %v1127
  %v1214 = vunpack.c.h.b16 %v1127
  %v1215 = vunpack.c.l.b16 %v1128
  %v1216 = vunpack.c.h.b16 %v1128
  %v1217 = vunpack.c.l.b16 %v1129
  %v1218 = vunpack.c.h.b16 %v1129
  %v1219 = vunpack.c.l.b16 %v1130
  %v1220 = vunpack.c.h.b16 %v1130
  %v1221 = vunpack.c.l.b16 %v1131
  %v1222 = vunpack.c.h.b16 %v1131
  %v1223 = vunpack.c.l.b16 %v1132
  %v1224 = vunpack.c.h.b16 %v1132
  %v1225 = vunpack.c.l.b16 %v1133
  %v1226 = vunpack.c.h.b16 %v1133
  %v1227 = vunpack.c.l.b16 %v1134
  %v1228 = vunpack.c.h.b16 %v1134
  %v1229 = vunpack.c.l.b16 %v1135
  %v1230 = vunpack.c.h.b16 %v1135
  %v1231 = vunpack.c.l.b16 %v1136
  %v1232 = vunpack.c.h.b16 %v1136
  %v1233 = vunpack.c.l.b16 %v1137
  %v1234 = vunpack.c.h.b16 %v1137
  %v1235 = vunpack.c.l.b16 %v1138
  %v1236 = vunpack.c.h.b16 %v1138
  %v1237 = vunpack.c.l.b16 %v1139
  %v1238 = vunpack.c.h.b16 %v1139
  %v1239 = vunpack.c.l.b16 %v1140
  %v1240 = vunpack.c.h.b16 %v1140
  %v1241 = vunpack.c.l.b16 %v1141
  %v1242 = vunpack.c.h.b16 %v1141
  %v1243 = vunpack.c.l.b16 %v1142
  %v1244 = vunpack.c.h.b16 %v1142
  %v1245 = vunpack.c.l.b16 %v1143
  %v1246 = vunpack.c.h.b16 %v1143
  %v1247 = vunpack.c.l.b16 %v1144
  %v1248 = vunpack.c.h.b16 %v1144
  %v1249 = vunpack.c.l.b16 %v1145
  %v1250 = vunpack.c.h.b16 %v1145
  %v1251 = vunpack.c.l.b16 %v1146
  %v1252 = vunpack.c.h.b16 %v1146
  %v1253 = vunpack.c.l.b16 %v1147
  %v1254 = vunpack.c.h.b16 %v1147
  %v1255 = vunpack.c.l.b16 %v1148
  %v1256 = vunpack.c.h.b16 %v1148
  %v1257 = vpack.c.b16 %v1195, %v1193
  %v1258 = vpack.c.b16 %v1196, %v1194
  %v1259 = vpack.c.b16 %v1199, %v1197
  %v1260 = vpack.c.b16 %v1200, %v1198
  %v1261 = vpack.c.b16 %v1203, %v1201
  %v1262 = vpack.c.b16 %v1204, %v1202
  %v1263 = vpack.c.b16 %v1207, %v1205
  %v1264 = vpack.c.b16 %v1208, %v1206
  %v1265 = vpack.c.b16 %v1211, %v1209
  %v1266 = vpack.c.b16 %v1212, %v1210
  %v1267 = vpack.c.b16 %v1215, %v1213
  %v1268 = vpack.c.b16 %v1216, %v1214
  %v1269 = vpack.c.b16 %v1219, %v1217
  %v1270 = vpack.c.b16 %v1220, %v1218
  %v1271 = vpack.c.b16 %v1223, %v1221
  %v1272 = vpack.c.b16 %v1224, %v1222
  %v1273 = vpack.c.b16 %v1227, %v1225
  %v1274 = vpack.c.b16 %v1228, %v1226
  %v1275 = vpack.c.b16 %v1231, %v1229
  %v1276 = vpack.c.b16 %v1232, %v1230
  %v1277 = vpack.c.b16 %v1235, %v1233
  %v1278 = vpack.c.b16 %v1236, %v1234
  %v1279 = vpack.c.b16 %v1239, %v1237
  %v1280 = vpack.c.b16 %v1240, %v1238
  %v1281 = vpack.c.b16 %v1243, %v1241
  %v1282 = vpack.c.b16 %v1244, %v1242
  %v1283 = vpack.c.b16 %v1247, %v1245
  %v1284 = vpack.c.b16 %v1248, %v1246
  %v1285 = vpack.c.b16 %v1251, %v1249
  %v1286 = vpack.c.b16 %v1252, %v1250
  %v1287 = vpack.c.b16 %v1255, %v1253
  %v1288 = vpack.c.b16 %v1256, %v1254
  %1321 = vmatprep.subr.bf16.mxu0 %v1258
  %1322 = vmatpush1.bf16.msra.mxu0 %v1257
  %1323 = vmatprep.subr.bf16.mxu0 %v1260
  %1324 = vmatpush1.bf16.msra.mxu0 %v1259
  %1325 = vmatprep.subr.bf16.mxu0 %v1262
  %1326 = vmatpush1.bf16.msra.mxu0 %v1261
  %1327 = vmatprep.subr.bf16.mxu0 %v1264
  %1328 = vmatpush1.bf16.msra.mxu0 %v1263
  %1329 = vmatprep.subr.bf16.mxu0 %v1266
  %1330 = vmatpush1.bf16.msra.mxu0 %v1265
  %1331 = vmatprep.subr.bf16.mxu0 %v1268
  %1332 = vmatpush1.bf16.msra.mxu0 %v1267
  %1333 = vmatprep.subr.bf16.mxu0 %v1270
  %1334 = vmatpush1.bf16.msra.mxu0 %v1269
  %1335 = vmatprep.subr.bf16.mxu0 %v1272
  %1336 = vmatpush1.bf16.msra.mxu0 %v1271
  %1337 = vmatprep.subr.bf16.mxu0 %v1274
  %1338 = vmatpush1.bf16.msra.mxu0 %v1273
  %1339 = vmatprep.subr.bf16.mxu0 %v1276
  %1340 = vmatpush1.bf16.msra.mxu0 %v1275
  %1341 = vmatprep.subr.bf16.mxu0 %v1278
  %1342 = vmatpush1.bf16.msra.mxu0 %v1277
  %1343 = vmatprep.subr.bf16.mxu0 %v1280
  %1344 = vmatpush1.bf16.msra.mxu0 %v1279
  %1345 = vmatprep.subr.bf16.mxu0 %v1282
  %1346 = vmatpush1.bf16.msra.mxu0 %v1281
  %1347 = vmatprep.subr.bf16.mxu0 %v1284
  %1348 = vmatpush1.bf16.msra.mxu0 %v1283
  %1349 = vmatprep.subr.bf16.mxu0 %v1286
  %1350 = vmatpush1.bf16.msra.mxu0 %v1285
  %1351 = vmatprep.subr.bf16.mxu0 %v1288
  %1352 = vmatpush1.bf16.msra.mxu0 %v1287
  %1353 = vmatprep.mubr.bf16.mxu0 %v1114
  %1354 = vmatmul.mubr.bf16.gmra.mrb[0].mxu0 %v1113
  %v1355 = vpop.f32.mrb[0].mxu0
  %v1356 = vadd.f32 %v1154, %v1355
  %v1357 = vpop.f32.mrb[0].mxu0
  %v1358 = vadd.f32 %v1158, %v1357
  %v1359 = vpop.f32.mrb[0].mxu0
  %v1360 = vadd.f32 %v1154, %v1359
  %v1361 = vpop.f32.mrb[0].mxu0
  %v1362 = vadd.f32 %v1158, %v1361
  %1363 = vmatprep.mubr.bf16.mxu0 %v1116
  %1364 = vmatmul.mubr.bf16.gmra.mrb[0].mxu0 %v1115
  %v1365 = vpop.f32.mrb[0].mxu0
  %v1366 = vadd.f32 %v1154, %v1365
  %v1367 = vpop.f32.mrb[0].mxu0
  %v1368 = vadd.f32 %v1158, %v1367
  %v1369 = vpop.f32.mrb[0].mxu0
  %v1370 = vadd.f32 %v1154, %v1369
  %v1371 = vpop.f32.mrb[0].mxu0
  %v1372 = vadd.f32 %v1158, %v1371
  %1373 = vdwg.mxu0
  %v1374 = vmax.f32 %v1356, 0.0
  %v1375 = vmax.f32 %v1358, 0.0
  %v1376 = vmax.f32 %v1360, 0.0
  %v1377 = vmax.f32 %v1362, 0.0
  %v1378 = vmax.f32 %v1366, 0.0
  %v1379 = vmax.f32 %v1368, 0.0
  %v1380 = vmax.f32 %v1370, 0.0
  %v1381 = vmax.f32 %v1372, 0.0
  %v1382 = vpack.c.bf16 %v1376, %v1374
  %v1383 = vpack.c.bf16 %v1377, %v1375
  %v1384 = vpack.c.bf16 %v1380, %v1378
  %v1385 = vpack.c.bf16 %v1381, %v1379
  %v1386 = vld [vmem:[%s7] sm:$0xf]
  %v1387 = vld [vmem:[%s7 + $0x4] sm:$0xf]
  %v1388 = vld [vmem:[%s7 + $0x8] sm:$0xf]
  %v1389 = vld [vmem:[%s7 + $0xc] sm:$0xf]
  %v1390 = vld [vmem:[%s7 + $0x10] sm:$0xf]
  %v1391 = vld [vmem:[%s7 + $0x14] sm:$0xf]
  %v1392 = vld [vmem:[%s7 + $0x18] sm:$0xf]
  %v1393 = vld [vmem:[%s7 + $0x1c] sm:$0xf]
  %v1394 = vld [vmem:[%s7 + $0x20] sm:$0xf]
  %v1395 = vld [vmem:[%s7 + $0x24] sm:$0xf]
  %v1396 = vld [vmem:[%s7 + $0x28] sm:$0xf]
  %v1397 = vld [vmem:[%s7 + $0x2c] sm:$0xf]
  %v1398 = vld [vmem:[%s7 + $0x30] sm:$0xf]
  %v1399 = vld [vmem:[%s7 + $0x34] sm:$0xf]
  %v1400 = vld [vmem:[%s7 + $0x38] sm:$0xf]
  %v1401 = vld [vmem:[%s7 + $0x3c] sm:$0xf]
  %v1402 = vld [vmem:[%s7 + $0x40] sm:$0xf]
  %v1403 = vld [vmem:[%s7 + $0x44] sm:$0xf]
  %v1404 = vld [vmem:[%s7 + $0x48] sm:$0xf]
  %v1405 = vld [vmem:[%s7 + $0x4c] sm:$0xf]
  %v1406 = vld [vmem:[%s7 + $0x50] sm:$0xf]
  %v1407 = vld [vmem:[%s7 + $0x54] sm:$0xf]
  %v1408 = vld [vmem:[%s7 + $0x58] sm:$0xf]
  %v1409 = vld [vmem:[%s7 + $0x5c] sm:$0xf]
  %v1410 = vld [vmem:[%s7 + $0x60] sm:$0xf]
  %v1411 = vld [vmem:[%s7 + $0x64] sm:$0xf]
  %v1412 = vld [vmem:[%s7 + $0x68] sm:$0xf]
  %v1413 = vld [vmem:[%s7 + $0x6c] sm:$0xf]
  %v1414 = vld [vmem:[%s7 + $0x70] sm:$0xf]
  %v1415 = vld [vmem:[%s7 + $0x74] sm:$0xf]
  %v1416 = vld [vmem:[%s7 + $0x78] sm:$0xf]
  %v1417 = vld [vmem:[%s7 + $0x7c] sm:$0xf]
  %v1418 = vld [vmem:[%s8] sm:$0x1]
  %v1420 = vlaneseq
  %v1421 = vshrl.u32 %v1420, 7
  %v1422 = vsub.s32 0, %v1421
  %v1423 = vrot.slane %v1418, %v1422
  %v1457 = vunpack.c.l.b16 %v1386
  %v1458 = vunpack.c.l.b16 %v1387
  %v1459 = vunpack.c.l.b16 %v1388
  %v1460 = vunpack.c.l.b16 %v1389
  %v1461 = vunpack.c.l.b16 %v1390
  %v1462 = vunpack.c.l.b16 %v1391
  %v1463 = vunpack.c.l.b16 %v1392
  %v1464 = vunpack.c.l.b16 %v1393
  %v1465 = vunpack.c.l.b16 %v1394
  %v1466 = vunpack.c.l.b16 %v1395
  %v1467 = vunpack.c.l.b16 %v1396
  %v1468 = vunpack.c.l.b16 %v1397
  %v1469 = vunpack.c.l.b16 %v1398
  %v1470 = vunpack.c.l.b16 %v1399
  %v1471 = vunpack.c.l.b16 %v1400
  %v1472 = vunpack.c.l.b16 %v1401
  %v1473 = vunpack.c.l.b16 %v1402
  %v1474 = vunpack.c.l.b16 %v1403
  %v1475 = vunpack.c.l.b16 %v1404
  %v1476 = vunpack.c.l.b16 %v1405
  %v1477 = vunpack.c.l.b16 %v1406
  %v1478 = vunpack.c.l.b16 %v1407
  %v1479 = vunpack.c.l.b16 %v1408
  %v1480 = vunpack.c.l.b16 %v1409
  %v1481 = vunpack.c.l.b16 %v1410
  %v1482 = vunpack.c.l.b16 %v1411
  %v1483 = vunpack.c.l.b16 %v1412
  %v1484 = vunpack.c.l.b16 %v1413
  %v1485 = vunpack.c.l.b16 %v1414
  %v1486 = vunpack.c.l.b16 %v1415
  %v1487 = vunpack.c.l.b16 %v1416
  %v1488 = vunpack.c.l.b16 %v1417
  %v1489 = vpack.c.b16 %v1458, %v1457
  %v1490 = vpack.c.b16 %v1460, %v1459
  %v1491 = vpack.c.b16 %v1462, %v1461
  %v1492 = vpack.c.b16 %v1464, %v1463
  %v1493 = vpack.c.b16 %v1466, %v1465
  %v1494 = vpack.c.b16 %v1468, %v1467
  %v1495 = vpack.c.b16 %v1470, %v1469
  %v1496 = vpack.c.b16 %v1472, %v1471
  %v1497 = vpack.c.b16 %v1474, %v1473
  %v1498 = vpack.c.b16 %v1476, %v1475
  %v1499 = vpack.c.b16 %v1478, %v1477
  %v1500 = vpack.c.b16 %v1480, %v1479
  %v1501 = vpack.c.b16 %v1482, %v1481
  %v1502 = vpack.c.b16 %v1484, %v1483
  %v1503 = vpack.c.b16 %v1486, %v1485
  %v1504 = vpack.c.b16 %v1488, %v1487
  %1521 = vmatprep.subr.bf16.mxu0 0
  %1522 = vmatpush1.bf16.msra.mxu0 %v1489
  %1523 = vmatprep.subr.bf16.mxu0 0
  %1524 = vmatpush1.bf16.msra.mxu0 %v1490
  %1525 = vmatprep.subr.bf16.mxu0 0
  %1526 = vmatpush1.bf16.msra.mxu0 %v1491
  %1527 = vmatprep.subr.bf16.mxu0 0
  %1528 = vmatpush1.bf16.msra.mxu0 %v1492
  %1529 = vmatprep.subr.bf16.mxu0 0
  %1530 = vmatpush1.bf16.msra.mxu0 %v1493
  %1531 = vmatprep.subr.bf16.mxu0 0
  %1532 = vmatpush1.bf16.msra.mxu0 %v1494
  %1533 = vmatprep.subr.bf16.mxu0 0
  %1534 = vmatpush1.bf16.msra.mxu0 %v1495
  %1535 = vmatprep.subr.bf16.mxu0 0
  %1536 = vmatpush1.bf16.msra.mxu0 %v1496
  %1537 = vmatprep.subr.bf16.mxu0 0
  %1538 = vmatpush1.bf16.msra.mxu0 %v1497
  %1539 = vmatprep.subr.bf16.mxu0 0
  %1540 = vmatpush1.bf16.msra.mxu0 %v1498
  %1541 = vmatprep.subr.bf16.mxu0 0
  %1542 = vmatpush1.bf16.msra.mxu0 %v1499
  %1543 = vmatprep.subr.bf16.mxu0 0
  %1544 = vmatpush1.bf16.msra.mxu0 %v1500
  %1545 = vmatprep.subr.bf16.mxu0 0
  %1546 = vmatpush1.bf16.msra.mxu0 %v1501
  %1547 = vmatprep.subr.bf16.mxu0 0
  %1548 = vmatpush1.bf16.msra.mxu0 %v1502
  %1549 = vmatprep.subr.bf16.mxu0 0
  %1550 = vmatpush1.bf16.msra.mxu0 %v1503
  %1551 = vmatprep.subr.bf16.mxu0 0
  %1552 = vmatpush1.bf16.msra.mxu0 %v1504
  %1553 = vmatprep.mubr.bf16.mxu0 %v1383
  %1554 = vmatmul.mubr.bf16.gmra.mrb[0].mxu0 %v1382
  %v1555 = vpop.f32.mrb[0].mxu0
  %v1556 = vadd.f32 %v1423, %v1555
  %v1557 = vpop.f32.mrb[0].mxu0
  %v1558 = vpop.f32.mrb[0].mxu0
  %v1559 = vadd.f32 %v1423, %v1558
  %v1560 = vpop.f32.mrb[0].mxu0
  %1561 = vmatprep.mubr.bf16.mxu0 %v1385
  %1562 = vmatmul.mubr.bf16.gmra.mrb[0].mxu0 %v1384
  %v1563 = vpop.f32.mrb[0].mxu0
  %v1564 = vadd.f32 %v1423, %v1563
  %v1565 = vpop.f32.mrb[0].mxu0
  %v1566 = vpop.f32.mrb[0].mxu0
  %v1567 = vadd.f32 %v1423, %v1566
  %v1568 = vpop.f32.mrb[0].mxu0
  %1569 = vdwg.mxu0
  %1570 = vst [vmem:[%s10] sm:$0xff] %v1556
  %1571 = vst [vmem:[%s10 + $0x8] sm:$0xff] %v1559
  %1572 = vst [vmem:[%s10 + $0x10] sm:$0xff] %v1564
  %1573 = vst [vmem:[%s10 + $0x18] sm:$0xff] %v1567
  // Predicated region
  $region38: #{forward.2} parent=0 // pred_check
    _
  $region39: #{forward.2} parent=0 // pred_check_branch
    %1575 = sbr.rel (0) target = $region41
  $region40: #{forward.2} parent=0 // pred_region
    _
  $region41: #{forward.2} parent=0 // pred_fallthru
    _
  // Predicated region
  $region42: #{forward.2} parent=0 // pred_check
    _
  $region43: #{forward.2} parent=0 // pred_check_branch
    %1577 = sbr.rel (0) target = $region45
  $region44: #{forward.2} parent=0 // pred_region
    _
  $region45: #{forward.2} parent=0 // pred_fallthru
    _
  // Predicated region
  $region46: #{forward.2} parent=0 // pred_check
    _
  $region47: #{forward.2} parent=0 // pred_check_branch
    %1579 = sbr.rel (0) target = $region49
  $region48: #{forward.2} parent=0 // pred_region
    _
  $region49: #{forward.2} parent=0 // pred_fallthru
    _
  // Predicated region
  $region50: #{forward.2} parent=0 // pred_check
    _
  $region51: #{forward.2} parent=0 // pred_check_branch
    %1581 = sbr.rel (0) target = $region53
  $region52: #{forward.2} parent=0 // pred_region
    _
  $region53: #{forward.2} parent=0 // pred_fallthru
    _

// kernel: forward.3
$region0: #{forward.3}
  #allocation0 [shape = 'u32[]', space=smem, size = 0x4, offset = 0x4, fixed_abs, tag = 'smem constant byte address 0x4 - core index']
  #allocation1 [shape = 'u32[144,128]{1,0:T(1,128)}', space=vmem, size = 0x12000, scoped, tag = 'internal scratch']
  %s0 = inlined_call_operand.vmem [shape: f32[2,128,128], index: 0, kind: input, shape index: {}]
  %s1 = inlined_call_operand.vmem [shape: f32[32,128], index: 1, kind: input, shape index: {}]
  %s2 = inlined_call_operand.vmem [shape: f32[128,128], index: 2, kind: input, shape index: {}]
  %s3 = inlined_call_operand.vmem [shape: f32[2,32,128], index: 3, kind: input, shape index: {}]
  %s4 = inlined_call_operand.vmem [shape: f32[2,32,128], index: 4, kind: output, shape index: {0}]
  %s5 = inlined_call_operand.vmem [shape: f32[2,32,128], index: 5, kind: output, shape index: {1}]
  %6 = xla_tuple %s4, %s5
  %s7 = sld [smem:[#allocation0]]
  $region57: #{forward.3} parent=0
    _
  %s9 = ssub.s32 1, %s7
  %s10 = scalar_select 0, %s9, %s7
  loop: start=0, step=1, limit=4
  $region2: #{forward.3} parent=0 // loop_pre_header
    _
  $region3: #{forward.3} parent=0 // loop_header
    %s12 = sphi 0, %s16
    %p13 = scmp.ge.s32.totalorder %s12, 4
    %s22 = sphi 0, %s24
    %s25 = sphi 0, %s22
    %s26 = sphi 0, %s25
    %s42 = sphi 0, %s26
    %s46 = sphi 0, %s46
    %s48 = sphi 0, %s46
    %s49 = sphi 0, %s48
    %s63 = sphi 0, %s49
    %s67 = sphi 0, %s67
    %s69 = sphi 0, %s67
    %s70 = sphi 0, %s69
    %s84 = sphi 0, %s70
    %s90 = sphi 0, %s92
    %s93 = sphi 0, %s90
    %s94 = sphi 0, %s93
    %s110 = sphi 0, %s94
    %s116 = sphi 0, %s118
    %s119 = sphi 0, %s116
    %s120 = sphi 0, %s119
    %s136 = sphi 0, %s120
    %s142 = sphi 0, %s144
    %s145 = sphi 0, %s142
    %s146 = sphi 0, %s145
    %s162 = sphi 0, %s146
  $region4: #{forward.3} parent=0 // loop_header_branch
    %15 = sbr.rel (%p13) target = $region8
  $region5: #{forward.3} parent=0 // loop_body
    %s17 = ssub.s32 %s12, 1
    %s18 = ssub.s32 %s12, 2
    %s19 = sadd.s32 %s12, 1
    %s20 = ssub.s32 %s12, %s19
    %p21 = scmp.eq.s32.totalorder %s20, 0
    %s23 = sadd.s32 %s22, 1
    %s24 = scalar_select %p21, %s22, %s23
    %p27 = pneg %p21
    %p28 = scmp.eq.s32.totalorder %s12, 1
    %p29 = por %p27, %p28
    %p30 = scmp.ne.s32.totalorder %s22, %s25
    %p31 = scmp.eq.s32.totalorder %s12, 0
    %p32 = por %p30, %p31
    %p33 = scmp.ne.s32.totalorder %s22, %s25
    %p34 = scmp.eq.s32.totalorder %s17, 1
    %p35 = por %p33, %p34
    %p36 = scmp.ne.s32.totalorder %s25, %s26
    %p37 = scmp.eq.s32.totalorder %s17, 0
    %p38 = por %p36, %p37
    %p39 = scmp.ne.s32.totalorder %s25, %s26
    %p40 = scmp.eq.s32.totalorder %s18, 1
    %p41 = por %p39, %p40
    %p43 = scmp.ne.s32.totalorder %s26, %s42
    %p44 = scmp.eq.s32.totalorder %s18, 0
    %p45 = por %p43, %p44
    %s47 = sadd.s32 %s46, 1
    %p50 = scmp.eq.s32.totalorder %s12, 1
    %p51 = scmp.ne.s32.totalorder %s46, %s48
    %p52 = scmp.eq.s32.totalorder %s12, 0
    %p53 = por %p51, %p52
    %p54 = scmp.ne.s32.totalorder %s46, %s48
    %p55 = scmp.eq.s32.totalorder %s17, 1
    %p56 = por %p54, %p55
    %p57 = scmp.ne.s32.totalorder %s48, %s49
    %p58 = scmp.eq.s32.totalorder %s17, 0
    %p59 = por %p57, %p58
    %p60 = scmp.ne.s32.totalorder %s48, %s49
    %p61 = scmp.eq.s32.totalorder %s18, 1
    %p62 = por %p60, %p61
    %p64 = scmp.ne.s32.totalorder %s49, %s63
    %p65 = scmp.eq.s32.totalorder %s18, 0
    %p66 = por %p64, %p65
    %s68 = sadd.s32 %s67, 1
    %p71 = scmp.eq.s32.totalorder %s12, 1
    %p72 = scmp.ne.s32.totalorder %s67, %s69
    %p73 = scmp.eq.s32.totalorder %s12, 0
    %p74 = por %p72, %p73
    %p75 = scmp.ne.s32.totalorder %s67, %s69
    %p76 = scmp.eq.s32.totalorder %s17, 1
    %p77 = por %p75, %p76
    %p78 = scmp.ne.s32.totalorder %s69, %s70
    %p79 = scmp.eq.s32.totalorder %s17, 0
    %p80 = por %p78, %p79
    %p81 = scmp.ne.s32.totalorder %s69, %s70
    %p82 = scmp.eq.s32.totalorder %s18, 1
    %p83 = por %p81, %p82
    %p85 = scmp.ne.s32.totalorder %s70, %s84
    %p86 = scmp.eq.s32.totalorder %s18, 0
    %p87 = por %p85, %p86
    %s88 = ssub.s32 %s12, %s19
    %p89 = scmp.eq.s32.totalorder %s88, 0
    %s91 = sadd.s32 %s90, 1
    %s92 = scalar_select %p89, %s90, %s91
    %p95 = pneg %p89
    %p96 = scmp.eq.s32.totalorder %s12, 1
    %p97 = por %p95, %p96
    %p98 = scmp.ne.s32.totalorder %s90, %s93
    %p99 = scmp.eq.s32.totalorder %s12, 0
    %p100 = por %p98, %p99
    %p101 = scmp.ne.s32.totalorder %s90, %s93
    %p102 = scmp.eq.s32.totalorder %s17, 1
    %p103 = por %p101, %p102
    %p104 = scmp.ne.s32.totalorder %s93, %s94
    %p105 = scmp.eq.s32.totalorder %s17, 0
    %p106 = por %p104, %p105
    %p107 = scmp.ne.s32.totalorder %s93, %s94
    %p108 = scmp.eq.s32.totalorder %s18, 1
    %p109 = por %p107, %p108
    %p111 = scmp.ne.s32.totalorder %s94, %s110
    %p112 = scmp.eq.s32.totalorder %s18, 0
    %p113 = por %p111, %p112
    %s114 = ssub.s32 %s12, %s19
    %p115 = scmp.eq.s32.totalorder %s114, 0
    %s117 = sadd.s32 %s116, 1
    %s118 = scalar_select %p115, %s116, %s117
    %p121 = pneg %p115
    %p122 = scmp.eq.s32.totalorder %s12, 1
    %p123 = por %p121, %p122
    %p124 = scmp.ne.s32.totalorder %s116, %s119
    %p125 = scmp.eq.s32.totalorder %s12, 0
    %p126 = por %p124, %p125
    %p127 = scmp.ne.s32.totalorder %s116, %s119
    %p128 = scmp.eq.s32.totalorder %s17, 1
    %p129 = por %p127, %p128
    %p130 = scmp.ne.s32.totalorder %s119, %s120
    %p131 = scmp.eq.s32.totalorder %s17, 0
    %p132 = por %p130, %p131
    %p133 = scmp.ne.s32.totalorder %s119, %s120
    %p134 = scmp.eq.s32.totalorder %s18, 1
    %p135 = por %p133, %p134
    %p137 = scmp.ne.s32.totalorder %s120, %s136
    %p138 = scmp.eq.s32.totalorder %s18, 0
    %p139 = por %p137, %p138
    %s140 = ssub.s32 %s12, %s19
    %p141 = scmp.eq.s32.totalorder %s140, 0
    %s143 = sadd.s32 %s142, 1
    %s144 = scalar_select %p141, %s142, %s143
    %p147 = pneg %p141
    %p148 = scmp.eq.s32.totalorder %s12, 1
    %p149 = por %p147, %p148
    %p150 = scmp.ne.s32.totalorder %s142, %s145
    %p151 = scmp.eq.s32.totalorder %s12, 0
    %p152 = por %p150, %p151
    %p153 = scmp.ne.s32.totalorder %s142, %s145
    %p154 = scmp.eq.s32.totalorder %s17, 1
    %p155 = por %p153, %p154
    %p156 = scmp.ne.s32.totalorder %s145, %s146
    %p157 = scmp.eq.s32.totalorder %s17, 0
    %p158 = por %p156, %p157
    %p159 = scmp.ne.s32.totalorder %s145, %s146
    %p160 = scmp.eq.s32.totalorder %s18, 1
    %p161 = por %p159, %p160
    %p163 = scmp.ne.s32.totalorder %s146, %s162
    %p164 = scmp.eq.s32.totalorder %s18, 0
    %p165 = por %p163, %p164
    %p166 = scmp.le.s32.totalorder 1, %s12
    %p167 = scmp.lt.s32.totalorder %s12, 3
    %p168 = pnand %p166, %p167
    %p169 = pneg %p168
    // Predicated region
    $region9: #{forward.3} parent=5 // pred_check
      _
    $region10: #{forward.3} parent=5 // pred_check_branch
      %171 = sbr.rel (%p168) target = $region12
    $region11: #{forward.3} parent=5 // pred_region
      %s172 = ssub.s32 %s12, 1
      // Predicated region
      $region13: #{forward.3} parent=11 // pred_check
        %p173 = pneg %p59
      $region14: #{forward.3} parent=11 // pred_check_branch
        %175 = sbr.rel (%p173) target = $region16
      $region15: #{forward.3} parent=11 // pred_region
        _
      $region16: #{forward.3} parent=11 // pred_fallthru
        _
      // Predicated region
      $region17: #{forward.3} parent=11 // pred_check
        %p176 = pneg %p80
      $region18: #{forward.3} parent=11 // pred_check_branch
        %178 = sbr.rel (%p176) target = $region20
      $region19: #{forward.3} parent=11 // pred_region
        _
      $region20: #{forward.3} parent=11 // pred_fallthru
        _
    $region12: #{forward.3} parent=5 // pred_fallthru
      _
    %p179 = scmp.lt.s32.totalorder %s12, 2
    // Predicated region
    $region21: #{forward.3} parent=5 // pred_check
      %p180 = pneg %p179
    $region22: #{forward.3} parent=5 // pred_check_branch
      %182 = sbr.rel (%p180) target = $region24
    $region23: #{forward.3} parent=5 // pred_region
      // Predicated region
      $region25: #{forward.3} parent=23 // pred_check
        %p183 = pneg %p32
      $region26: #{forward.3} parent=23 // pred_check_branch
        %185 = sbr.rel (%p183) target = $region28
      $region27: #{forward.3} parent=23 // pred_region
        %p186 = scmp.lt.s32.totalorder %s12, 1
        %s187 = scalar_select %p186, %s12, 1
        %s188 = smul.addr %s187, 16
        %s189 = smul.addr %s188, 8
        %s190 = scalar_lea.vmem %s0, %s189
      $region28: #{forward.3} parent=23 // pred_fallthru
        _
      // Predicated region
      $region29: #{forward.3} parent=23 // pred_check
        %p191 = pneg %p100
      $region30: #{forward.3} parent=23 // pred_check_branch
        %193 = sbr.rel (%p191) target = $region32
      $region31: #{forward.3} parent=23 // pred_region
        %p194 = scmp.lt.s32.totalorder %s12, 1
        %s195 = scalar_select %p194, %s12, 1
        %s196 = smul.addr %s195, 4
        %s197 = smul.addr %s196, 8
        %s198 = scalar_lea.vmem %s3, %s197
      $region32: #{forward.3} parent=23 // pred_fallthru
        _
    $region24: #{forward.3} parent=5 // pred_fallthru
      _
    %p199 = scmp.le.s32.totalorder 1, %s12
    %p200 = scmp.lt.s32.totalorder %s12, 3
    %p201 = pnand %p199, %p200
    %p202 = pneg %p201
    // Predicated region
    $region33: #{forward.3} parent=5 // pred_check
      _
    $region34: #{forward.3} parent=5 // pred_check_branch
      %204 = sbr.rel (%p201) target = $region36
    $region35: #{forward.3} parent=5 // pred_region
      %s205 = ssub.s32 %s12, 1
      %p206 = scmp.lt.s32.totalorder %s17, 1
      %s207 = scalar_select %p206, %s17, 1
      %s208 = smul.addr %s207, 16
      %s209 = smul.addr %s208, 8
      %s210 = scalar_lea.vmem %s0, %s209
      %p211 = pneg %p38
      %p212 = pneg %p35
      %p213 = pneg %p59
      %p214 = pneg %p56
      %p215 = pneg %p80
      %p216 = pneg %p77
      %p217 = scmp.lt.s32.totalorder %s17, 1
      %s218 = scalar_select %p217, %s17, 1
      %s219 = smul.addr %s218, 4
      %s220 = smul.addr %s219, 8
      %s221 = scalar_lea.vmem %s3, %s220
      %p222 = pneg %p106
      %p223 = pneg %p103
      %p224 = pneg %p132
      %p225 = pneg %p129
      %p226 = scmp.lt.s32.totalorder %s17, 1
      %s227 = scalar_select %p226, %s17, 1
      %s228 = smul.addr %s227, 4
      %s229 = smul.addr %s228, 8
      %s230 = scalar_lea.vmem %s4, %s229
      %p231 = pneg %p158
      %p232 = pneg %p155
      %p233 = scmp.lt.s32.totalorder %s17, 1
      %s234 = scalar_select %p233, %s17, 1
      %s235 = smul.addr %s234, 4
      %s236 = smul.addr %s235, 8
      %s237 = scalar_lea.vmem %s5, %s236
      %p238 = scmp.lt.s32.totalorder %s17, 1
      %s239 = scalar_select %p238, %s17, 1
      %s240 = smul.addr %s239, 16
      %s241 = smul.addr %s240, 8
      %s242 = scalar_lea.vmem %s0, %s241
      %p243 = scmp.lt.s32.totalorder %s17, 1
      %s244 = scalar_select %p243, %s17, 1
      %s245 = smul.addr %s244, 4
      %s246 = smul.addr %s245, 8
      %s247 = scalar_lea.vmem %s3, %s246
      %p248 = scmp.lt.s32.totalorder %s17, 1
      %s249 = scalar_select %p248, %s17, 1
      %s250 = smul.addr %s249, 4
      %s251 = smul.addr %s250, 8
      %s252 = scalar_lea.vmem %s4, %s251
      %p253 = scmp.lt.s32.totalorder %s17, 1
      %s254 = scalar_select %p253, %s17, 1
      %s255 = smul.addr %s254, 4
      %s256 = smul.addr %s255, 8
      %s257 = scalar_lea.vmem %s5, %s256
      %v258 = vld [vmem:[%s242] sm:$0xff]
      %v259 = vld [vmem:[%s242 + $0x8] sm:$0xff]
      %v260 = vld [vmem:[%s242 + $0x10] sm:$0xff]
      %v261 = vld [vmem:[%s242 + $0x18] sm:$0xff]
      %v262 = vld [vmem:[%s242 + $0x20] sm:$0xff]
      %v263 = vld [vmem:[%s242 + $0x28] sm:$0xff]
      %v264 = vld [vmem:[%s242 + $0x30] sm:$0xff]
      %v265 = vld [vmem:[%s242 + $0x38] sm:$0xff]
      %v266 = vld [vmem:[%s242 + $0x40] sm:$0xff]
      %v267 = vld [vmem:[%s242 + $0x48] sm:$0xff]
      %v268 = vld [vmem:[%s242 + $0x50] sm:$0xff]
      %v269 = vld [vmem:[%s242 + $0x58] sm:$0xff]
      %v270 = vld [vmem:[%s242 + $0x60] sm:$0xff]
      %v271 = vld [vmem:[%s242 + $0x68] sm:$0xff]
      %v272 = vld [vmem:[%s242 + $0x70] sm:$0xff]
      %v273 = vld [vmem:[%s242 + $0x78] sm:$0xff]
      %v274 = vld [vmem:[%s1] sm:$0xff]
      %v275 = vld [vmem:[%s1 + $0x8] sm:$0xff]
      %v276 = vld [vmem:[%s1 + $0x10] sm:$0xff]
      %v277 = vld [vmem:[%s1 + $0x18] sm:$0xff]
      %278 = vmatprep.subr.mxu0 0.0
      %279 = vmatpush1.msra.mxu0 %v258
      %280 = vmatprep.subr.mxu0 0.0
      %281 = vmatpush1.msra.mxu0 %v259
      %282 = vmatprep.subr.mxu0 0.0
      %283 = vmatpush1.msra.mxu0 %v260
      %284 = vmatprep.subr.mxu0 0.0
      %285 = vmatpush1.msra.mxu0 %v261
      %286 = vmatprep.subr.mxu0 0.0
      %287 = vmatpush1.msra.mxu0 %v262
      %288 = vmatprep.subr.mxu0 0.0
      %289 = vmatpush1.msra.mxu0 %v263
      %290 = vmatprep.subr.mxu0 0.0
      %291 = vmatpush1.msra.mxu0 %v264
      %292 = vmatprep.subr.mxu0 0.0
      %293 = vmatpush1.msra.mxu0 %v265
      %294 = vmatprep.subr.mxu0 0.0
      %295 = vmatpush1.msra.mxu0 %v266
      %296 = vmatprep.subr.mxu0 0.0
      %297 = vmatpush1.msra.mxu0 %v267
      %298 = vmatprep.subr.mxu0 0.0
      %299 = vmatpush1.msra.mxu0 %v268
      %300 = vmatprep.subr.mxu0 0.0
      %301 = vmatpush1.msra.mxu0 %v269
      %302 = vmatprep.subr.mxu0 0.0
      %303 = vmatpush1.msra.mxu0 %v270
      %304 = vmatprep.subr.mxu0 0.0
      %305 = vmatpush1.msra.mxu0 %v271
      %306 = vmatprep.subr.mxu0 0.0
      %307 = vmatpush1.msra.mxu0 %v272
      %308 = vmatprep.subr.mxu0 0.0
      %309 = vmatpush1.msra.mxu0 %v273
      %310 = vmatprep.subr.mxu0 0.0
      %311 = vmatpush1.msra.mxu0 0.0
      %312 = vmatprep.subr.mxu0 0.0
      %313 = vmatpush1.msra.mxu0 0.0
      %314 = vmatprep.subr.mxu0 0.0
      %315 = vmatpush1.msra.mxu0 0.0
      %316 = vmatprep.subr.mxu0 0.0
      %317 = vmatpush1.msra.mxu0 0.0
      %318 = vmatprep.subr.mxu0 0.0
      %319 = vmatpush1.msra.mxu0 0.0
      %320 = vmatprep.subr.mxu0 0.0
      %321 = vmatpush1.msra.mxu0 0.0
      %322 = vmatprep.subr.mxu0 0.0
      %323 = vmatpush1.msra.mxu0 0.0
      %324 = vmatprep.subr.mxu0 0.0
      %325 = vmatpush1.msra.mxu0 0.0
      %326 = vmatprep.subr.mxu0 0.0
      %327 = vmatpush1.msra.mxu0 0.0
      %328 = vmatprep.subr.mxu0 0.0
      %329 = vmatpush1.msra.mxu0 0.0
      %330 = vmatprep.subr.mxu0 0.0
      %331 = vmatpush1.msra.mxu0 0.0
      %332 = vmatprep.subr.mxu0 0.0
      %333 = vmatpush1.msra.mxu0 0.0
      %334 = vmatprep.subr.mxu0 0.0
      %335 = vmatpush1.msra.mxu0 0.0
      %336 = vmatprep.subr.mxu0 0.0
      %337 = vmatpush1.msra.mxu0 0.0
      %338 = vmatprep.subr.mxu0 0.0
      %339 = vmatpush1.msra.mxu0 0.0
      %340 = vmatprep.subr.mxu0 0.0
      %341 = vmatpush1.msra.mxu0 0.0
      %342 = vmatprep.mubr.f32.mxu0 0.0
      %343 = vmatmul.mubr.f32.gmra.mrb[0].mxu0 %v274
      %v344 = vpop.f32.mrb[0].mxu0
      %v345 = vadd.f32 0.0, %v344
      %v346 = vpop.f32.mrb[0].mxu0
      %347 = vmatprep.mubr.f32.mxu0 0.0
      %348 = vmatmul.mubr.f32.gmra.mrb[0].mxu0 %v275
      %v349 = vpop.f32.mrb[0].mxu0
      %v350 = vadd.f32 0.0, %v349
      %v351 = vpop.f32.mrb[0].mxu0
      %352 = vmatprep.mubr.f32.mxu0 0.0
      %353 = vmatmul.mubr.f32.gmra.mrb[0].mxu0 %v276
      %v354 = vpop.f32.mrb[0].mxu0
      %v355 = vadd.f32 0.0, %v354
      %v356 = vpop.f32.mrb[0].mxu0
      %357 = vmatprep.mubr.f32.mxu0 0.0
      %358 = vmatmul.mubr.f32.gmra.mrb[0].mxu0 %v277
      %v359 = vpop.f32.mrb[0].mxu0
      %v360 = vadd.f32 0.0, %v359
      %v361 = vpop.f32.mrb[0].mxu0
      %362 = vdwg.mxu0
      %v363 = vld [vmem:[%s2] sm:$0xff]
      %v364 = vld [vmem:[%s2 + $0x8] sm:$0xff]
      %v365 = vld [vmem:[%s2 + $0x10] sm:$0xff]
      %v366 = vld [vmem:[%s2 + $0x18] sm:$0xff]
      %v367 = vld [vmem:[%s2 + $0x20] sm:$0xff]
      %v368 = vld [vmem:[%s2 + $0x28] sm:$0xff]
      %v369 = vld [vmem:[%s2 + $0x30] sm:$0xff]
      %v370 = vld [vmem:[%s2 + $0x38] sm:$0xff]
      %v371 = vld [vmem:[%s2 + $0x40] sm:$0xff]
      %v372 = vld [vmem:[%s2 + $0x48] sm:$0xff]
      %v373 = vld [vmem:[%s2 + $0x50] sm:$0xff]
      %v374 = vld [vmem:[%s2 + $0x58] sm:$0xff]
      %v375 = vld [vmem:[%s2 + $0x60] sm:$0xff]
      %v376 = vld [vmem:[%s2 + $0x68] sm:$0xff]
      %v377 = vld [vmem:[%s2 + $0x70] sm:$0xff]
      %v378 = vld [vmem:[%s2 + $0x78] sm:$0xff]
      %379 = vmatprep.subr.mxu0 0.0
      %380 = vmatpush1.msra.mxu0 %v363
      %381 = vmatprep.subr.mxu0 0.0
      %382 = vmatpush1.msra.mxu0 %v364
      %383 = vmatprep.subr.mxu0 0.0
      %384 = vmatpush1.msra.mxu0 %v365
      %385 = vmatprep.subr.mxu0 0.0
      %386 = vmatpush1.msra.mxu0 %v366
      %387 = vmatprep.subr.mxu0 0.0
      %388 = vmatpush1.msra.mxu0 %v367
      %389 = vmatprep.subr.mxu0 0.0
      %390 = vmatpush1.msra.mxu0 %v368
      %391 = vmatprep.subr.mxu0 0.0
      %392 = vmatpush1.msra.mxu0 %v369
      %393 = vmatprep.subr.mxu0 0.0
      %394 = vmatpush1.msra.mxu0 %v370
      %395 = vmatprep.subr.mxu0 0.0
      %396 = vmatpush1.msra.mxu0 %v371
      %397 = vmatprep.subr.mxu0 0.0
      %398 = vmatpush1.msra.mxu0 %v372
      %399 = vmatprep.subr.mxu0 0.0
      %400 = vmatpush1.msra.mxu0 %v373
      %401 = vmatprep.subr.mxu0 0.0
      %402 = vmatpush1.msra.mxu0 %v374
      %403 = vmatprep.subr.mxu0 0.0
      %404 = vmatpush1.msra.mxu0 %v375
      %405 = vmatprep.subr.mxu0 0.0
      %406 = vmatpush1.msra.mxu0 %v376
      %407 = vmatprep.subr.mxu0 0.0
      %408 = vmatpush1.msra.mxu0 %v377
      %409 = vmatprep.subr.mxu0 0.0
      %410 = vmatpush1.msra.mxu0 %v378
      %411 = vmatprep.subr.mxu0 0.0
      %412 = vmatpush1.msra.mxu0 0.0
      %413 = vmatprep.subr.mxu0 0.0
      %414 = vmatpush1.msra.mxu0 0.0
      %415 = vmatprep.subr.mxu0 0.0
      %416 = vmatpush1.msra.mxu0 0.0
      %417 = vmatprep.subr.mxu0 0.0
      %418 = vmatpush1.msra.mxu0 0.0
      %419 = vmatprep.subr.mxu0 0.0
      %420 = vmatpush1.msra.mxu0 0.0
      %421 = vmatprep.subr.mxu0 0.0
      %422 = vmatpush1.msra.mxu0 0.0
      %423 = vmatprep.subr.mxu0 0.0
      %424 = vmatpush1.msra.mxu0 0.0
      %425 = vmatprep.subr.mxu0 0.0
      %426 = vmatpush1.msra.mxu0 0.0
      %427 = vmatprep.subr.mxu0 0.0
      %428 = vmatpush1.msra.mxu0 0.0
      %429 = vmatprep.subr.mxu0 0.0
      %430 = vmatpush1.msra.mxu0 0.0
      %431 = vmatprep.subr.mxu0 0.0
      %432 = vmatpush1.msra.mxu0 0.0
      %433 = vmatprep.subr.mxu0 0.0
      %434 = vmatpush1.msra.mxu0 0.0
      %435 = vmatprep.subr.mxu0 0.0
      %436 = vmatpush1.msra.mxu0 0.0
      %437 = vmatprep.subr.mxu0 0.0
      %438 = vmatpush1.msra.mxu0 0.0
      %439 = vmatprep.subr.mxu0 0.0
      %440 = vmatpush1.msra.mxu0 0.0
      %441 = vmatprep.subr.mxu0 0.0
      %442 = vmatpush1.msra.mxu0 0.0
      %443 = vmatprep.mubr.f32.mxu0 0.0
      %444 = vmatmul.mubr.f32.gmra.mrb[0].mxu0 %v345
      %v445 = vpop.f32.mrb[0].mxu0
      %v446 = vadd.f32 0.0, %v445
      %v447 = vpop.f32.mrb[0].mxu0
      %448 = vmatprep.mubr.f32.mxu0 0.0
      %449 = vmatmul.mubr.f32.gmra.mrb[0].mxu0 %v350
      %v450 = vpop.f32.mrb[0].mxu0
      %v451 = vadd.f32 0.0, %v450
      %v452 = vpop.f32.mrb[0].mxu0
      %453 = vmatprep.mubr.f32.mxu0 0.0
      %454 = vmatmul.mubr.f32.gmra.mrb[0].mxu0 %v355
      %v455 = vpop.f32.mrb[0].mxu0
      %v456 = vadd.f32 0.0, %v455
      %v457 = vpop.f32.mrb[0].mxu0
      %458 = vmatprep.mubr.f32.mxu0 0.0
      %459 = vmatmul.mubr.f32.gmra.mrb[0].mxu0 %v360
      %v460 = vpop.f32.mrb[0].mxu0
      %v461 = vadd.f32 0.0, %v460
      %v462 = vpop.f32.mrb[0].mxu0
      %463 = vdwg.mxu0
      %v464 = vld [vmem:[%s247] sm:$0xff]
      %v465 = vld [vmem:[%s247 + $0x8] sm:$0xff]
      %v466 = vld [vmem:[%s247 + $0x10] sm:$0xff]
      %v467 = vld [vmem:[%s247 + $0x18] sm:$0xff]
      %v468 = vxor.u32 %v446, 2147483648
      %v469 = vxor.u32 %v451, 2147483648
      %v470 = vxor.u32 %v456, 2147483648
      %v471 = vxor.u32 %v461, 2147483648
      %v472 = vmul.f32 %v468, 1.442695
      %v473 = vpow.pop %v472
      %v474 = vmul.f32 %v469, 1.442695
      %v475 = vpow.pop %v474
      %v476 = vmul.f32 %v470, 1.442695
      %v477 = vpow.pop %v476
      %v478 = vmul.f32 %v471, 1.442695
      %v479 = vpow.pop %v478
      %v480 = vadd.f32 %v473, 1.0
      %v481 = vadd.f32 %v475, 1.0
      %v482 = vadd.f32 %v477, 1.0
      %v483 = vadd.f32 %v479, 1.0
      %v484 = vrcp.pop %v480
      %v485 = vmul.f32 1.0, %v484
      %v486 = vrcp.pop %v481
      %v487 = vmul.f32 1.0, %v486
      %v488 = vrcp.pop %v482
      %v489 = vmul.f32 1.0, %v488
      %v490 = vrcp.pop %v483
      %v491 = vmul.f32 1.0, %v490
      %v492 = vmax.f32 %v446, 0.0
      %v493 = vmax.f32 %v451, 0.0
      %v494 = vmax.f32 %v456, 0.0
      %v495 = vmax.f32 %v461, 0.0
      %v496 = vmul.f32 %v446, %v464
      %v497 = vmul.f32 %v451, %v465
      %v498 = vmul.f32 %v456, %v466
      %v499 = vmul.f32 %v461, %v467
      %v500 = vsub.f32 %v492, %v496
      %v501 = vsub.f32 %v493, %v497
      %v502 = vsub.f32 %v494, %v498
      %v503 = vsub.f32 %v495, %v499
      %v504 = vand.u32 2147483647, %v446
      %v505 = vand.u32 2147483647, %v451
      %v506 = vand.u32 2147483647, %v456
      %v507 = vand.u32 2147483647, %v461
      %v508 = vsub.f32 0.0, %v504
      %v509 = vsub.f32 0.0, %v505
      %v510 = vsub.f32 0.0, %v506
      %v511 = vsub.f32 0.0, %v507
      %v512 = vmul.f32 %v508, 1.442695
      %v513 = vpow.pop %v512
      %v514 = vmul.f32 %v509, 1.442695
      %v515 = vpow.pop %v514
      %v516 = vmul.f32 %v510, 1.442695
      %v517 = vpow.pop %v516
      %v518 = vmul.f32 %v511, 1.442695
      %v519 = vpow.pop %v518
      %v520 = vadd.f32 %v513, 1.0
      %v521 = vlog2.pop %v520
      %v522 = vmul.f32 %v521, 0.6931472
      %v523 = vmul.f32 -0.5, %v513
      %v524 = vadd.f32 %v523, 1.0
      %v525 = vmul.f32 %v524, %v513
      %v526 = vand.u32 2147483647, %v513
      %vm527 = vcmp.lt.f32.partialorder %v526, 0.0004427343
      %v528 = vsel %vm527, %v525, %v522
      %v529 = vadd.f32 %v515, 1.0
      %v530 = vlog2.pop %v529
      %v531 = vmul.f32 %v530, 0.6931472
      %v532 = vmul.f32 -0.5, %v515
      %v533 = vadd.f32 %v532, 1.0
      %v534 = vmul.f32 %v533, %v515
      %v535 = vand.u32 2147483647, %v515
      %vm536 = vcmp.lt.f32.partialorder %v535, 0.0004427343
      %v537 = vsel %vm536, %v534, %v531
      %v538 = vadd.f32 %v517, 1.0
      %v539 = vlog2.pop %v538
      %v540 = vmul.f32 %v539, 0.6931472
      %v541 = vmul.f32 -0.5, %v517
      %v542 = vadd.f32 %v541, 1.0
      %v543 = vmul.f32 %v542, %v517
      %v544 = vand.u32 2147483647, %v517
      %vm545 = vcmp.lt.f32.partialorder %v544, 0.0004427343
      %v546 = vsel %vm545, %v543, %v540
      %v547 = vadd.f32 %v519, 1.0
      %v548 = vlog2.pop %v547
      %v549 = vmul.f32 %v548, 0.6931472
      %v550 = vmul.f32 -0.5, %v519
      %v551 = vadd.f32 %v550, 1.0
      %v552 = vmul.f32 %v551, %v519
      %v553 = vand.u32 2147483647, %v519
      %vm554 = vcmp.lt.f32.partialorder %v553, 0.0004427343
      %v555 = vsel %vm554, %v552, %v549
      %v556 = vadd.f32 %v500, %v528
      %v557 = vadd.f32 %v501, %v537
      %v558 = vadd.f32 %v502, %v546
      %v559 = vadd.f32 %v503, %v555
      %v560 = vmul.f32 %v485, %v464
      %v561 = vmul.f32 %v487, %v465
      %v562 = vmul.f32 %v489, %v466
      %v563 = vmul.f32 %v491, %v467
      %v564 = vsub.f32 1.0, %v485
      %v565 = vsub.f32 1.0, %v487
      %v566 = vsub.f32 1.0, %v489
      %v567 = vsub.f32 1.0, %v491
      %v568 = vsub.f32 1.0, %v464
      %v569 = vsub.f32 1.0, %v465
      %v570 = vsub.f32 1.0, %v466
      %v571 = vsub.f32 1.0, %v467
      %v572 = vmul.f32 %v564, %v568
      %v573 = vmul.f32 %v565, %v569
      %v574 = vmul.f32 %v566, %v570
      %v575 = vmul.f32 %v567, %v571
      %v576 = vadd.f32 %v560, %v572
      %v577 = vadd.f32 %v561, %v573
      %v578 = vadd.f32 %v562, %v574
      %v579 = vadd.f32 %v563, %v575
      %v580 = vsub.f32 1.0, %v576
      %v581 = vsub.f32 1.0, %v577
      %v582 = vsub.f32 1.0, %v578
      %v583 = vsub.f32 1.0, %v579
      %v584 = vmul.f32 %v580, %v580
      %v585 = vmul.f32 %v581, %v581
      %v586 = vmul.f32 %v582, %v582
      %v587 = vmul.f32 %v583, %v583
      %v588 = vmul.f32 %v556, %v584
      %v589 = vmul.f32 %v557, %v585
      %v590 = vmul.f32 %v558, %v586
      %v591 = vmul.f32 %v559, %v587
      %v592 = vmul.f32 %v464, 0.95
      %v593 = vmul.f32 %v465, 0.95
      %v594 = vmul.f32 %v466, 0.95
      %v595 = vmul.f32 %v467, 0.95
      %v596 = vmul.f32 %v568, 0.05
      %v597 = vmul.f32 %v569, 0.05
      %v598 = vmul.f32 %v570, 0.05
      %v599 = vmul.f32 %v571, 0.05
      %v600 = vadd.f32 %v592, %v596
      %v601 = vadd.f32 %v593, %v597
      %v602 = vadd.f32 %v594, %v598
      %v603 = vadd.f32 %v595, %v599
      %604 = vst [vmem:[%s252] sm:$0xff] %v485
      %605 = vst [vmem:[%s252 + $0x8] sm:$0xff] %v487
      %606 = vst [vmem:[%s252 + $0x10] sm:$0xff] %v489
      %607 = vst [vmem:[%s252 + $0x18] sm:$0xff] %v491
      %v608 = vmul.f32 %v600, %v588
      %v609 = vmul.f32 %v601, %v589
      %v610 = vmul.f32 %v602, %v590
      %v611 = vmul.f32 %v603, %v591
      %612 = vst [vmem:[%s257] sm:$0xff] %v608
      %613 = vst [vmem:[%s257 + $0x8] sm:$0xff] %v609
      %614 = vst [vmem:[%s257 + $0x10] sm:$0xff] %v610
      %615 = vst [vmem:[%s257 + $0x18] sm:$0xff] %v611
      %p616 = scmp.lt.s32.totalorder %s17, 1
      %s617 = scalar_select %p616, %s17, 1
      %s618 = smul.addr %s617, 4
      %s619 = smul.addr %s618, 8
      %s620 = scalar_lea.vmem %s4, %s619
      %p621 = scmp.lt.s32.totalorder %s17, 1
      %s622 = scalar_select %p621, %s17, 1
      %s623 = smul.addr %s622, 4
      %s624 = smul.addr %s623, 8
      %s625 = scalar_lea.vmem %s5, %s624
      // Predicated region
      $region37: #{forward.3} parent=35 // pred_check
        %p626 = pneg %p129
      $region38: #{forward.3} parent=35 // pred_check_branch
        %628 = sbr.rel (%p626) target = $region40
      $region39: #{forward.3} parent=35 // pred_region
        _
      $region40: #{forward.3} parent=35 // pred_fallthru
        _
      // Predicated region
      $region41: #{forward.3} parent=35 // pred_check
        %p629 = pneg %p155
      $region42: #{forward.3} parent=35 // pred_check_branch
        %631 = sbr.rel (%p629) target = $region44
      $region43: #{forward.3} parent=35 // pred_region
        _
      $region44: #{forward.3} parent=35 // pred_fallthru
        _
    $region36: #{forward.3} parent=5 // pred_fallthru
      _
    %p632 = scmp.le.s32.totalorder 2, %s12
    // Predicated region
    $region45: #{forward.3} parent=5 // pred_check
      %p633 = pneg %p632
    $region46: #{forward.3} parent=5 // pred_check_branch
      %635 = sbr.rel (%p633) target = $region48
    $region47: #{forward.3} parent=5 // pred_region
      %s636 = ssub.s32 %s12, 2
      // Predicated region
      $region49: #{forward.3} parent=47 // pred_check
        %p637 = pneg %p135
      $region50: #{forward.3} parent=47 // pred_check_branch
        %639 = sbr.rel (%p637) target = $region52
      $region51: #{forward.3} parent=47 // pred_region
        %p640 = scmp.lt.s32.totalorder %s18, 1
        %s641 = scalar_select %p640, %s18, 1
        %s642 = smul.addr %s641, 4
        %s643 = smul.addr %s642, 8
        %s644 = scalar_lea.vmem %s4, %s643
      $region52: #{forward.3} parent=47 // pred_fallthru
        _
      // Predicated region
      $region53: #{forward.3} parent=47 // pred_check
        %p645 = pneg %p161
      $region54: #{forward.3} parent=47 // pred_check_branch
        %647 = sbr.rel (%p645) target = $region56
      $region55: #{forward.3} parent=47 // pred_region
        %p648 = scmp.lt.s32.totalorder %s18, 1
        %s649 = scalar_select %p648, %s18, 1
        %s650 = smul.addr %s649, 4
        %s651 = smul.addr %s650, 8
        %s652 = scalar_lea.vmem %s5, %s651
      $region56: #{forward.3} parent=47 // pred_fallthru
        _
    $region48: #{forward.3} parent=5 // pred_fallthru
      _
  $region6: #{forward.3} parent=0 // loop_footer
    %s16 = sadd.s32 1, %s12
  $region7: #{forward.3} parent=0 // loop_footer_branch
    %11 = sbr.rel target = $region3
  $region8: #{forward.3} parent=0 // loop_exit
    _

</llo_original>
